<compile_context>
chip_gen: v7x
topology: tpu7x:2x2x1
jax: 0.10.0
libtpu: 0.0.40
codegen_flags: <defaults>
</compile_context>

<pallas_src>
import functools

import jax
import jax.numpy as jnp
from jax.experimental import pallas as pl
from jax.experimental.pallas import tpu as pltpu


def _layer_norm_f32(x, w, b, eps=1e-5):
    mu = jnp.mean(x, axis=-1, keepdims=True)
    xc = x - mu
    var = jnp.mean(xc * xc, axis=-1, keepdims=True)
    return xc * jax.lax.rsqrt(var + eps) * w + b


def fused_encoder_kernel(src_ref, pos_ref,
                         wqk_ref, bqk_ref, wv_ref, bv_ref, wo_ref, bo_ref,
                         w1_ref, b1_ref, w2_ref, b2_ref,
                         ln1w_ref, ln1b_ref, ln2w_ref, ln2b_ref,
                         out_ref, x_ref,
                         *, num_heads, compute_dtype):
    """One (batch element, layer) grid step.

    src/pos/out blocks: (1, S, E); weight blocks: (1, ...) indexed by layer.
    x_ref: f32 VMEM scratch (S, E) carrying the residual stream across layers.
    """
    l = pl.program_id(1)

    @pl.when(l == 0)
    def _():
        x_ref[...] = src_ref[0].astype(jnp.float32)

    x = x_ref[...]                                  # (S, E) f32 residual stream
    S, E = x.shape
    H = num_heads
    Dh = E // H
    cdt = compute_dtype

    pos = pos_ref[0].astype(jnp.float32)

    # --- self attention: q = k = x + pos, v = x  (scale folded into Wq/bq) ---
    qk_in = (x + pos).astype(cdt)
    qk = jnp.dot(qk_in, wqk_ref[0], preferred_element_type=jnp.float32) + bqk_ref[0]  # (S, 2E)
    v = jnp.dot(x.astype(cdt), wv_ref[0], preferred_element_type=jnp.float32) + bv_ref[0]  # (S, E)

    def to_heads(t, base):                          # (S, *) -> (H, S, Dh)
        return jnp.stack(
            [t[:, base + h * Dh: base + (h + 1) * Dh] for h in range(H)], axis=0
        ).astype(cdt)

    qh = to_heads(qk, 0)
    kh = to_heads(qk, E)
    vh = to_heads(v, 0)

    # head-batched score / context matmuls (single MXU passes over all heads)
    s = jnp.einsum('hqd,hkd->hqk', qh, kh, preferred_element_type=jnp.float32)
    s = s - jnp.max(s, axis=-1, keepdims=True)
    p = jnp.exp(s)
    p = p * pl.reciprocal(jnp.sum(p, axis=-1, keepdims=True), approx=True)
    ctx = jnp.einsum('hqk,hkd->hqd', p.astype(cdt), vh,
                     preferred_element_type=jnp.float32)        # (H, S, Dh)

    ctx2 = jnp.concatenate([ctx[h] for h in range(H)], axis=-1)  # (S, E)
    attn = (jnp.dot(ctx2.astype(cdt), wo_ref[0],
                    preferred_element_type=jnp.float32) + bo_ref[0])

    # --- residual + norm1 (f32) ---
    x1 = _layer_norm_f32(x + attn, ln1w_ref[0], ln1b_ref[0])

    # --- FFN: linear2(relu(linear1(x1))) ---
    h1 = jnp.dot(x1.astype(cdt), w1_ref[0],
                 preferred_element_type=jnp.float32) + b1_ref[0]
    h1 = jnp.maximum(h1, 0.0)
    ff = jnp.dot(h1.astype(cdt), w2_ref[0],
                 preferred_element_type=jnp.float32) + b2_ref[0]

    # --- residual + norm2 (f32) ---
    y = _layer_norm_f32(x1 + ff, ln2w_ref[0], ln2b_ref[0])

    x_ref[...] = y                                  # carry to next layer
    out_ref[0] = y.astype(out_ref.dtype)            # written back once per n


def _prepare_stacked_params(layer_params, num_heads, weight_dtype):
    """PyTorch-layout params -> pre-transposed, scale-folded, layer-stacked."""
    E = layer_params[0]["out_w"].shape[0]
    Dh = E // num_heads
    scale = 1.0 / (Dh ** 0.5)

    wqk, bqk, wv, bv, wo, bo = [], [], [], [], [], []
    w1, b1, w2, b2 = [], [], [], []
    ln1w, ln1b, ln2w, ln2b = [], [], [], []
    for p in layer_params:
        in_w = p["in_w"]                    # (3E, E) packed [Wq; Wk; Wv]
        in_b = p["in_b"][0]                 # (3E,)
        wq_t = in_w[:E].T * scale           # fold 1/sqrt(Dh) into q projection
        wk_t = in_w[E:2 * E].T
        wv_t = in_w[2 * E:].T
        bq = in_b[:E] * scale
        bk = in_b[E:2 * E]
        bv_ = in_b[2 * E:]

        wqk.append(jnp.concatenate([wq_t, wk_t], axis=1).astype(weight_dtype))  # (E, 2E)
        bqk.append(jnp.concatenate([bq, bk])[None, :].astype(jnp.float32))      # (1, 2E)
        wv.append(wv_t.astype(weight_dtype))                                    # (E, E)
        bv.append(bv_[None, :].astype(jnp.float32))                             # (1, E)
        wo.append(p["out_w"].T.astype(weight_dtype))                            # (E, E)
        bo.append(p["out_b"].astype(jnp.float32))                               # (1, E)
        w1.append(p["w1"].T.astype(weight_dtype))                               # (E, F)
        b1.append(p["b1"].astype(jnp.float32))                                  # (1, F)
        w2.append(p["w2"].T.astype(weight_dtype))                               # (F, E)
        b2.append(p["b2"].astype(jnp.float32))                                  # (1, E)
        ln1w.append(p["ln1_w"].astype(jnp.float32))                             # (1, E)
        ln1b.append(p["ln1_b"].astype(jnp.float32))
        ln2w.append(p["ln2_w"].astype(jnp.float32))
        ln2b.append(p["ln2_b"].astype(jnp.float32))

    st = lambda xs: jnp.stack(xs, axis=0)            # add leading layer axis L
    return [st(wqk), st(bqk), st(wv), st(bv), st(wo), st(bo),
            st(w1), st(b1), st(w2), st(b2),
            st(ln1w), st(ln1b), st(ln2w), st(ln2b)]


def transformer_encoder(src_sne, pos_sne, layer_params, num_heads,
                        weight_dtype=None):
    """src_sne, pos_sne: (S, N, E) -- PyTorch seq-first convention."""
    S, N, E = src_sne.shape
    L = len(layer_params)
    weight_dtype = weight_dtype or src_sne.dtype

    x_nse = jnp.transpose(src_sne, (1, 0, 2))        # (N, S, E)
    pos_nse = jnp.transpose(pos_sne, (1, 0, 2))
    stacked = _prepare_stacked_params(layer_params, num_heads, weight_dtype)

    act_spec = pl.BlockSpec((1, S, E), lambda n, l: (n, 0, 0))

    def layer_spec(arr):
        return pl.BlockSpec((1,) + arr.shape[1:], lambda n, l: (l, 0, 0))

    kernel = functools.partial(fused_encoder_kernel,
                               num_heads=num_heads,
                               compute_dtype=weight_dtype)

    out_nse = pl.pallas_call(
        kernel,
        out_shape=jax.ShapeDtypeStruct((N, S, E), src_sne.dtype),
        grid_spec=pltpu.PrefetchScalarGridSpec(
            num_scalar_prefetch=0,
            grid=(N, L),                              # layers inner ("arbitrary")
            in_specs=[act_spec, act_spec] + [layer_spec(a) for a in stacked],
            out_specs=act_spec,
            scratch_shapes=[pltpu.VMEM((S, E), jnp.float32)],
        ),
        compiler_params=pltpu.CompilerParams(
            dimension_semantics=("parallel", "arbitrary")),
    )(x_nse, pos_nse, *stacked)

    return jnp.transpose(out_nse, (1, 0, 2))          # back to (S, N, E)


# ---------------- pure-JAX reference (for correctness check) ----------------
def _ref_layer(src, pos, p, H):
    # src/pos: (S, N, E)
    S, N, E = src.shape
    Dh = E // H
    scale = 1.0 / (Dh ** 0.5)
    qk_in = src + pos
    in_w, in_b = p["in_w"], p["in_b"][0]
    q = qk_in @ in_w[0:E].T + in_b[0:E]
    k = qk_in @ in_w[E:2 * E].T + in_b[E:2 * E]
    v = src @ in_w[2 * E:3 * E].T + in_b[2 * E:3 * E]

    def split(x):  # (S, N, E) -> (N, H, S, Dh)
        return x.reshape(S, N, H, Dh).transpose(1, 2, 0, 3)

    qh, kh, vh = split(q), split(k), split(v)
    s = jnp.einsum("nhsd,nhtd->nhst", qh, kh) * scale
    pmat = jax.nn.softmax(s, axis=-1)
    a = jnp.einsum("nhst,nhtd->nhsd", pmat, vh)           # (N, H, S, Dh)
    a = a.transpose(2, 0, 1, 3).reshape(S, N, E)
    a = a @ p["out_w"].T + p["out_b"][0]

    def ln(x, w, b):
        mu = x.mean(-1, keepdims=True)
        var = ((x - mu) ** 2).mean(-1, keepdims=True)
        return (x - mu) * jax.lax.rsqrt(var + 1e-5) * w[0] + b[0]

    x = ln(src + a, p["ln1_w"], p["ln1_b"])
    ff = jnp.maximum(x @ p["w1"].T + p["b1"][0], 0.0) @ p["w2"].T + p["b2"][0]
    return ln(x + ff, p["ln2_w"], p["ln2_b"])


def _ref_encoder(src, pos, layer_params, H):
    x = src
    for p in layer_params:
        x = _ref_layer(x, pos, p, H)
    return x


# ---------------------------- parameter init --------------------------------
def init_layer_params(key, hidden_dim, ffn_dim):
    ks = jax.random.split(key, 4)
    E, F = hidden_dim, ffn_dim
    return {
        "in_w": 0.05 * jax.random.normal(ks[0], (3 * E, E), jnp.float32),
        "in_b": jnp.zeros((1, 3 * E), jnp.float32),
        "out_w": 0.05 * jax.random.normal(ks[1], (E, E), jnp.float32),
        "out_b": jnp.zeros((1, E), jnp.float32),
        "w1": 0.05 * jax.random.normal(ks[2], (F, E), jnp.float32),
        "b1": jnp.zeros((1, F), jnp.float32),
        "w2": 0.05 * jax.random.normal(ks[3], (E, F), jnp.float32),
        "b2": jnp.zeros((1, E), jnp.float32),
        "ln1_w": jnp.ones((1, E), jnp.float32),
        "ln1_b": jnp.zeros((1, E), jnp.float32),
        "ln2_w": jnp.ones((1, E), jnp.float32),
        "ln2_b": jnp.zeros((1, E), jnp.float32),
    }


if __name__ == "__main__":
    # small shapes: seq=8, batch=2, hidden=32, heads=4, ffn=64, layers=2
    # (note: real DETR configs should use E multiples of 128 for lane-dense stores)
    S, N, E, H, FFN, L = 8, 2, 32, 4, 64, 2

    key = jax.random.PRNGKey(0)
    k_src, k_pos, k_par = jax.random.split(key, 3)
    src = jax.random.normal(k_src, (S, N, E), jnp.float32)
    pos = jax.random.normal(k_pos, (S, N, E), jnp.float32)

    layer_keys = jax.random.split(k_par, L)
    layer_params = [init_layer_params(layer_keys[i], E, FFN) for i in range(L)]

    out = transformer_encoder(src, pos, layer_params, H)
    out = jax.block_until_ready(out)

    ref = _ref_encoder(src, pos, layer_params, H)
    assert out.shape == (S, N, E)
    # Tolerance loosened vs exact f32 because the softmax normalization uses
    # the approximate EUP reciprocal (pl.reciprocal(..., approx=True)).
    assert jnp.allclose(out, ref, atol=1e-2, rtol=1e-2), "mismatch vs reference"

    print("KERNEL_OK")
</pallas_src>

<mosaic_0001>
module attributes {stable_mosaic.version = 11 : i64} {
  func.func @fused_encoder_kernel(%arg0: i32, %arg1: i32, %arg2: memref<1x8x32xf32, #tpu.memory_space<vmem>>, %arg3: memref<1x8x32xf32, #tpu.memory_space<vmem>>, %arg4: memref<1x32x64xf32, #tpu.memory_space<vmem>>, %arg5: memref<1x1x64xf32, #tpu.memory_space<vmem>>, %arg6: memref<1x32x32xf32, #tpu.memory_space<vmem>>, %arg7: memref<1x1x32xf32, #tpu.memory_space<vmem>>, %arg8: memref<1x32x32xf32, #tpu.memory_space<vmem>>, %arg9: memref<1x1x32xf32, #tpu.memory_space<vmem>>, %arg10: memref<1x32x64xf32, #tpu.memory_space<vmem>>, %arg11: memref<1x1x64xf32, #tpu.memory_space<vmem>>, %arg12: memref<1x64x32xf32, #tpu.memory_space<vmem>>, %arg13: memref<1x1x32xf32, #tpu.memory_space<vmem>>, %arg14: memref<1x1x32xf32, #tpu.memory_space<vmem>>, %arg15: memref<1x1x32xf32, #tpu.memory_space<vmem>>, %arg16: memref<1x1x32xf32, #tpu.memory_space<vmem>>, %arg17: memref<1x1x32xf32, #tpu.memory_space<vmem>>, %arg18: memref<1x8x32xf32, #tpu.memory_space<vmem>>, %arg19: memref<8x32xf32, #tpu.memory_space<vmem>>) attributes {dimension_semantics = [#tpu.dimension_semantics<parallel>, #tpu.dimension_semantics<arbitrary>], iteration_bounds = array<i64: 2, 2>, scalar_prefetch = 0 : i64, scratch_operands = 1 : i64, tpu.core_type = #tpu.core_type<tc>, window_params = [{transform_indices = @transform_0, window_bounds = array<i64: 1, 8, 32>}, {transform_indices = @transform_1, window_bounds = array<i64: 1, 8, 32>}, {transform_indices = @transform_2, window_bounds = array<i64: 1, 32, 64>}, {transform_indices = @transform_3, window_bounds = array<i64: 1, 1, 64>}, {transform_indices = @transform_4, window_bounds = array<i64: 1, 32, 32>}, {transform_indices = @transform_5, window_bounds = array<i64: 1, 1, 32>}, {transform_indices = @transform_6, window_bounds = array<i64: 1, 32, 32>}, {transform_indices = @transform_7, window_bounds = array<i64: 1, 1, 32>}, {transform_indices = @transform_8, window_bounds = array<i64: 1, 32, 64>}, {transform_indices = @transform_9, window_bounds = array<i64: 1, 1, 64>}, {transform_indices = @transform_10, window_bounds = array<i64: 1, 64, 32>}, {transform_indices = @transform_11, window_bounds = array<i64: 1, 1, 32>}, {transform_indices = @transform_12, window_bounds = array<i64: 1, 1, 32>}, {transform_indices = @transform_13, window_bounds = array<i64: 1, 1, 32>}, {transform_indices = @transform_14, window_bounds = array<i64: 1, 1, 32>}, {transform_indices = @transform_15, window_bounds = array<i64: 1, 1, 32>}, {transform_indices = @transform_16, window_bounds = array<i64: 1, 8, 32>}]} {
    %c0_i32 = arith.constant 0 : i32
    %0 = arith.cmpi eq, %arg1, %c0_i32 : i32
    %1 = arith.extui %0 : i1 to i32
    %c0_i32_0 = arith.constant 0 : i32
    %2 = arith.cmpi ne, %1, %c0_i32_0 : i32
    scf.if %2 {
      %c0_71 = arith.constant 0 : index
      %c0_72 = arith.constant 0 : index
      %c0_73 = arith.constant 0 : index
      %146 = vector.load %arg2[%c0_71, %c0_72, %c0_73] : memref<1x8x32xf32, #tpu.memory_space<vmem>>, vector<1x8x32xf32>
      %147 = vector.shape_cast %146 : vector<1x8x32xf32> to vector<8x32xf32>
      %c0_74 = arith.constant 0 : index
      %c0_75 = arith.constant 0 : index
      %148 = vector.load %arg19[%c0_74, %c0_75] : memref<8x32xf32, #tpu.memory_space<vmem>>, vector<8x32xf32>
      tpu.vector_store %arg19[%c0_74, %c0_75], %147 {strides = array<i32>} : memref<8x32xf32, #tpu.memory_space<vmem>>, vector<8x32xf32>,
    } else {
    }
    %c0 = arith.constant 0 : index
    %c0_1 = arith.constant 0 : index
    %3 = vector.load %arg19[%c0, %c0_1] : memref<8x32xf32, #tpu.memory_space<vmem>>, vector<8x32xf32>
    %c0_2 = arith.constant 0 : index
    %c0_3 = arith.constant 0 : index
    %c0_4 = arith.constant 0 : index
    %4 = vector.load %arg3[%c0_2, %c0_3, %c0_4] : memref<1x8x32xf32, #tpu.memory_space<vmem>>, vector<1x8x32xf32>
    %5 = vector.shape_cast %4 : vector<1x8x32xf32> to vector<8x32xf32>
    %6 = arith.addf %3, %5 : vector<8x32xf32>
    %c0_5 = arith.constant 0 : index
    %c0_6 = arith.constant 0 : index
    %c0_7 = arith.constant 0 : index
    %7 = vector.load %arg4[%c0_5, %c0_6, %c0_7] : memref<1x32x64xf32, #tpu.memory_space<vmem>>, vector<1x32x64xf32>
    %8 = vector.shape_cast %7 : vector<1x32x64xf32> to vector<32x64xf32>
    %cst = arith.constant dense<0.000000e+00> : vector<8x64xf32>
    %9 = tpu.matmul %6, %8, %cst {dimension_numbers = #tpu.dot_dimension_numbers<[1], [0], [0], [1], [0, 0, 1, 1], [], []>} : vector<8x32xf32>, vector<32x64xf32>, vector<8x64xf32> -> vector<8x64xf32>
    %c0_8 = arith.constant 0 : index
    %c0_9 = arith.constant 0 : index
    %c0_10 = arith.constant 0 : index
    %10 = vector.load %arg5[%c0_8, %c0_9, %c0_10] : memref<1x1x64xf32, #tpu.memory_space<vmem>>, vector<1x1x64xf32>
    %11 = vector.shape_cast %10 : vector<1x1x64xf32> to vector<1x64xf32>
    %12 = vector.broadcast %11 : vector<1x64xf32> to vector<8x64xf32>
    %13 = arith.addf %9, %12 : vector<8x64xf32>
    %c0_11 = arith.constant 0 : index
    %c0_12 = arith.constant 0 : index
    %c0_13 = arith.constant 0 : index
    %14 = vector.load %arg6[%c0_11, %c0_12, %c0_13] : memref<1x32x32xf32, #tpu.memory_space<vmem>>, vector<1x32x32xf32>
    %15 = vector.shape_cast %14 : vector<1x32x32xf32> to vector<32x32xf32>
    %cst_14 = arith.constant dense<0.000000e+00> : vector<8x32xf32>
    %16 = tpu.matmul %3, %15, %cst_14 {dimension_numbers = #tpu.dot_dimension_numbers<[1], [0], [0], [1], [0, 0, 1, 1], [], []>} : vector<8x32xf32>, vector<32x32xf32>, vector<8x32xf32> -> vector<8x32xf32>
    %c0_15 = arith.constant 0 : index
    %c0_16 = arith.constant 0 : index
    %c0_17 = arith.constant 0 : index
    %17 = vector.load %arg7[%c0_15, %c0_16, %c0_17] : memref<1x1x32xf32, #tpu.memory_space<vmem>>, vector<1x1x32xf32>
    %18 = vector.shape_cast %17 : vector<1x1x32xf32> to vector<1x32xf32>
    %19 = vector.broadcast %18 : vector<1x32xf32> to vector<8x32xf32>
    %20 = arith.addf %16, %19 : vector<8x32xf32>
    %21 = vector.extract_strided_slice %13 {offsets = [0, 0], sizes = [8, 8], strides = [1, 1]} : vector<8x64xf32> to vector<8x8xf32>
    %22 = vector.extract_strided_slice %13 {offsets = [0, 8], sizes = [8, 8], strides = [1, 1]} : vector<8x64xf32> to vector<8x8xf32>
    %23 = vector.extract_strided_slice %13 {offsets = [0, 16], sizes = [8, 8], strides = [1, 1]} : vector<8x64xf32> to vector<8x8xf32>
    %24 = vector.extract_strided_slice %13 {offsets = [0, 24], sizes = [8, 8], strides = [1, 1]} : vector<8x64xf32> to vector<8x8xf32>
    %25 = vector.shape_cast %21 : vector<8x8xf32> to vector<1x8x8xf32>
    %26 = vector.shape_cast %22 : vector<8x8xf32> to vector<1x8x8xf32>
    %27 = vector.shape_cast %23 : vector<8x8xf32> to vector<1x8x8xf32>
    %28 = vector.shape_cast %24 : vector<8x8xf32> to vector<1x8x8xf32>
    %29 = tpu.concatenate %25, %26, %27, %28 in 0 : vector<1x8x8xf32>, vector<1x8x8xf32>, vector<1x8x8xf32>, vector<1x8x8xf32> -> vector<4x8x8xf32>
    %30 = vector.extract_strided_slice %13 {offsets = [0, 32], sizes = [8, 8], strides = [1, 1]} : vector<8x64xf32> to vector<8x8xf32>
    %31 = vector.extract_strided_slice %13 {offsets = [0, 40], sizes = [8, 8], strides = [1, 1]} : vector<8x64xf32> to vector<8x8xf32>
    %32 = vector.extract_strided_slice %13 {offsets = [0, 48], sizes = [8, 8], strides = [1, 1]} : vector<8x64xf32> to vector<8x8xf32>
    %33 = vector.extract_strided_slice %13 {offsets = [0, 56], sizes = [8, 8], strides = [1, 1]} : vector<8x64xf32> to vector<8x8xf32>
    %34 = vector.shape_cast %30 : vector<8x8xf32> to vector<1x8x8xf32>
    %35 = vector.shape_cast %31 : vector<8x8xf32> to vector<1x8x8xf32>
    %36 = vector.shape_cast %32 : vector<8x8xf32> to vector<1x8x8xf32>
    %37 = vector.shape_cast %33 : vector<8x8xf32> to vector<1x8x8xf32>
    %38 = tpu.concatenate %34, %35, %36, %37 in 0 : vector<1x8x8xf32>, vector<1x8x8xf32>, vector<1x8x8xf32>, vector<1x8x8xf32> -> vector<4x8x8xf32>
    %39 = vector.extract_strided_slice %20 {offsets = [0, 0], sizes = [8, 8], strides = [1, 1]} : vector<8x32xf32> to vector<8x8xf32>
    %40 = vector.extract_strided_slice %20 {offsets = [0, 8], sizes = [8, 8], strides = [1, 1]} : vector<8x32xf32> to vector<8x8xf32>
    %41 = vector.extract_strided_slice %20 {offsets = [0, 16], sizes = [8, 8], strides = [1, 1]} : vector<8x32xf32> to vector<8x8xf32>
    %42 = vector.extract_strided_slice %20 {offsets = [0, 24], sizes = [8, 8], strides = [1, 1]} : vector<8x32xf32> to vector<8x8xf32>
    %43 = vector.shape_cast %39 : vector<8x8xf32> to vector<1x8x8xf32>
    %44 = vector.shape_cast %40 : vector<8x8xf32> to vector<1x8x8xf32>
    %45 = vector.shape_cast %41 : vector<8x8xf32> to vector<1x8x8xf32>
    %46 = vector.shape_cast %42 : vector<8x8xf32> to vector<1x8x8xf32>
    %47 = tpu.concatenate %43, %44, %45, %46 in 0 : vector<1x8x8xf32>, vector<1x8x8xf32>, vector<1x8x8xf32>, vector<1x8x8xf32> -> vector<4x8x8xf32>
    "tpu.trace_start"() <{level = 10 : i32, message = "hqd,hkd->hqk"}> : () -> ()
    %cst_18 = arith.constant dense<0.000000e+00> : vector<4x8x8xf32>
    %48 = tpu.matmul %29, %38, %cst_18 {dimension_numbers = #tpu.dot_dimension_numbers<[2], [2], [1], [1], [0, 0, 0, 1, 1, 1], [0], [0]>} : vector<4x8x8xf32>, vector<4x8x8xf32>, vector<4x8x8xf32> -> vector<4x8x8xf32>
    "tpu.trace_stop"() : () -> ()
    %cst_19 = arith.constant dense<0xFF800000> : vector<4x8xf32>
    %49 = vector.multi_reduction <maximumf>, %48, %cst_19 [2] : vector<4x8x8xf32> to vector<4x8xf32>
    %50 = vector.shape_cast %49 : vector<4x8xf32> to vector<4x8x1xf32>
    %51 = vector.broadcast %50 : vector<4x8x1xf32> to vector<4x8x8xf32>
    %52 = arith.subf %48, %51 : vector<4x8x8xf32>
    %53 = math.exp %52 : vector<4x8x8xf32>
    %cst_20 = arith.constant dense<0.000000e+00> : vector<4x8xf32>
    %54 = vector.multi_reduction <add>, %53, %cst_20 [2] : vector<4x8x8xf32> to vector<4x8xf32>
    %55 = vector.shape_cast %54 : vector<4x8xf32> to vector<4x8x1xf32>
    %56 = tpu.reciprocal %55 {approx = true} : vector<4x8x1xf32> -> vector<4x8x1xf32>
    %57 = vector.broadcast %56 : vector<4x8x1xf32> to vector<4x8x8xf32>
    %58 = arith.mulf %53, %57 : vector<4x8x8xf32>
    "tpu.trace_start"() <{level = 10 : i32, message = "hqk,hkd->hqd"}> : () -> ()
    %cst_21 = arith.constant dense<0.000000e+00> : vector<4x8x8xf32>
    %59 = tpu.matmul %58, %47, %cst_21 {dimension_numbers = #tpu.dot_dimension_numbers<[2], [1], [1], [2], [0, 0, 0, 1, 1, 2], [0], [0]>} : vector<4x8x8xf32>, vector<4x8x8xf32>, vector<4x8x8xf32> -> vector<4x8x8xf32>
    "tpu.trace_stop"() : () -> ()
    %60 = vector.extract_strided_slice %59 {offsets = [0, 0, 0], sizes = [1, 8, 8], strides = [1, 1, 1]} : vector<4x8x8xf32> to vector<1x8x8xf32>
    %61 = vector.shape_cast %60 : vector<1x8x8xf32> to vector<8x8xf32>
    %62 = vector.extract_strided_slice %59 {offsets = [1, 0, 0], sizes = [1, 8, 8], strides = [1, 1, 1]} : vector<4x8x8xf32> to vector<1x8x8xf32>
    %63 = vector.shape_cast %62 : vector<1x8x8xf32> to vector<8x8xf32>
    %64 = vector.extract_strided_slice %59 {offsets = [2, 0, 0], sizes = [1, 8, 8], strides = [1, 1, 1]} : vector<4x8x8xf32> to vector<1x8x8xf32>
    %65 = vector.shape_cast %64 : vector<1x8x8xf32> to vector<8x8xf32>
    %66 = vector.extract_strided_slice %59 {offsets = [3, 0, 0], sizes = [1, 8, 8], strides = [1, 1, 1]} : vector<4x8x8xf32> to vector<1x8x8xf32>
    %67 = vector.shape_cast %66 : vector<1x8x8xf32> to vector<8x8xf32>
    %68 = tpu.concatenate %61, %63, %65, %67 in 1 : vector<8x8xf32>, vector<8x8xf32>, vector<8x8xf32>, vector<8x8xf32> -> vector<8x32xf32>
    %c0_22 = arith.constant 0 : index
    %c0_23 = arith.constant 0 : index
    %c0_24 = arith.constant 0 : index
    %69 = vector.load %arg8[%c0_22, %c0_23, %c0_24] : memref<1x32x32xf32, #tpu.memory_space<vmem>>, vector<1x32x32xf32>
    %70 = vector.shape_cast %69 : vector<1x32x32xf32> to vector<32x32xf32>
    %cst_25 = arith.constant dense<0.000000e+00> : vector<8x32xf32>
    %71 = tpu.matmul %68, %70, %cst_25 {dimension_numbers = #tpu.dot_dimension_numbers<[1], [0], [0], [1], [0, 0, 1, 1], [], []>} : vector<8x32xf32>, vector<32x32xf32>, vector<8x32xf32> -> vector<8x32xf32>
    %c0_26 = arith.constant 0 : index
    %c0_27 = arith.constant 0 : index
    %c0_28 = arith.constant 0 : index
    %72 = vector.load %arg9[%c0_26, %c0_27, %c0_28] : memref<1x1x32xf32, #tpu.memory_space<vmem>>, vector<1x1x32xf32>
    %73 = vector.shape_cast %72 : vector<1x1x32xf32> to vector<1x32xf32>
    %74 = vector.broadcast %73 : vector<1x32xf32> to vector<8x32xf32>
    %75 = arith.addf %71, %74 : vector<8x32xf32>
    %76 = arith.addf %3, %75 : vector<8x32xf32>
    %c0_29 = arith.constant 0 : index
    %c0_30 = arith.constant 0 : index
    %c0_31 = arith.constant 0 : index
    %77 = vector.load %arg14[%c0_29, %c0_30, %c0_31] : memref<1x1x32xf32, #tpu.memory_space<vmem>>, vector<1x1x32xf32>
    %78 = vector.shape_cast %77 : vector<1x1x32xf32> to vector<1x32xf32>
    %c0_32 = arith.constant 0 : index
    %c0_33 = arith.constant 0 : index
    %c0_34 = arith.constant 0 : index
    %79 = vector.load %arg15[%c0_32, %c0_33, %c0_34] : memref<1x1x32xf32, #tpu.memory_space<vmem>>, vector<1x1x32xf32>
    %80 = vector.shape_cast %79 : vector<1x1x32xf32> to vector<1x32xf32>
    %cst_35 = arith.constant dense<0.000000e+00> : vector<8xf32>
    %81 = vector.multi_reduction <add>, %76, %cst_35 [1] : vector<8x32xf32> to vector<8xf32>
    %82 = vector.shape_cast %81 : vector<8xf32> to vector<8x1xf32>
    %cst_36 = arith.constant 3.200000e+01 : f32
    %83 = vector.broadcast %cst_36 : f32 to vector<8x1xf32>
    %84 = arith.divf %82, %83 : vector<8x1xf32>
    %85 = vector.broadcast %84 : vector<8x1xf32> to vector<8x32xf32>
    %86 = arith.subf %76, %85 : vector<8x32xf32>
    %87 = arith.mulf %86, %86 : vector<8x32xf32>
    %cst_37 = arith.constant dense<0.000000e+00> : vector<8xf32>
    %88 = vector.multi_reduction <add>, %87, %cst_37 [1] : vector<8x32xf32> to vector<8xf32>
    %89 = vector.shape_cast %88 : vector<8xf32> to vector<8x1xf32>
    %cst_38 = arith.constant 3.200000e+01 : f32
    %90 = vector.broadcast %cst_38 : f32 to vector<8x1xf32>
    %91 = arith.divf %89, %90 : vector<8x1xf32>
    %cst_39 = arith.constant 9.99999974E-6 : f32
    %92 = vector.broadcast %cst_39 : f32 to vector<8x1xf32>
    %93 = arith.addf %91, %92 : vector<8x1xf32>
    %94 = math.rsqrt %93 : vector<8x1xf32>
    %95 = vector.broadcast %94 : vector<8x1xf32> to vector<8x32xf32>
    %96 = arith.mulf %86, %95 : vector<8x32xf32>
    %97 = vector.broadcast %78 : vector<1x32xf32> to vector<8x32xf32>
    %98 = arith.mulf %96, %97 : vector<8x32xf32>
    %99 = vector.broadcast %80 : vector<1x32xf32> to vector<8x32xf32>
    %100 = arith.addf %98, %99 : vector<8x32xf32>
    %c0_40 = arith.constant 0 : index
    %c0_41 = arith.constant 0 : index
    %c0_42 = arith.constant 0 : index
    %101 = vector.load %arg10[%c0_40, %c0_41, %c0_42] : memref<1x32x64xf32, #tpu.memory_space<vmem>>, vector<1x32x64xf32>
    %102 = vector.shape_cast %101 : vector<1x32x64xf32> to vector<32x64xf32>
    %cst_43 = arith.constant dense<0.000000e+00> : vector<8x64xf32>
    %103 = tpu.matmul %100, %102, %cst_43 {dimension_numbers = #tpu.dot_dimension_numbers<[1], [0], [0], [1], [0, 0, 1, 1], [], []>} : vector<8x32xf32>, vector<32x64xf32>, vector<8x64xf32> -> vector<8x64xf32>
    %c0_44 = arith.constant 0 : index
    %c0_45 = arith.constant 0 : index
    %c0_46 = arith.constant 0 : index
    %104 = vector.load %arg11[%c0_44, %c0_45, %c0_46] : memref<1x1x64xf32, #tpu.memory_space<vmem>>, vector<1x1x64xf32>
    %105 = vector.shape_cast %104 : vector<1x1x64xf32> to vector<1x64xf32>
    %106 = vector.broadcast %105 : vector<1x64xf32> to vector<8x64xf32>
    %107 = arith.addf %103, %106 : vector<8x64xf32>
    %cst_47 = arith.constant 0.000000e+00 : f32
    %108 = vector.broadcast %cst_47 : f32 to vector<8x64xf32>
    %109 = arith.maximumf %107, %108 : vector<8x64xf32>
    %c0_48 = arith.constant 0 : index
    %c0_49 = arith.constant 0 : index
    %c0_50 = arith.constant 0 : index
    %110 = vector.load %arg12[%c0_48, %c0_49, %c0_50] : memref<1x64x32xf32, #tpu.memory_space<vmem>>, vector<1x64x32xf32>
    %111 = vector.shape_cast %110 : vector<1x64x32xf32> to vector<64x32xf32>
    %cst_51 = arith.constant dense<0.000000e+00> : vector<8x32xf32>
    %112 = tpu.matmul %109, %111, %cst_51 {dimension_numbers = #tpu.dot_dimension_numbers<[1], [0], [0], [1], [0, 0, 1, 1], [], []>} : vector<8x64xf32>, vector<64x32xf32>, vector<8x32xf32> -> vector<8x32xf32>
    %c0_52 = arith.constant 0 : index
    %c0_53 = arith.constant 0 : index
    %c0_54 = arith.constant 0 : index
    %113 = vector.load %arg13[%c0_52, %c0_53, %c0_54] : memref<1x1x32xf32, #tpu.memory_space<vmem>>, vector<1x1x32xf32>
    %114 = vector.shape_cast %113 : vector<1x1x32xf32> to vector<1x32xf32>
    %115 = vector.broadcast %114 : vector<1x32xf32> to vector<8x32xf32>
    %116 = arith.addf %112, %115 : vector<8x32xf32>
    %117 = arith.addf %100, %116 : vector<8x32xf32>
    %c0_55 = arith.constant 0 : index
    %c0_56 = arith.constant 0 : index
    %c0_57 = arith.constant 0 : index
    %118 = vector.load %arg16[%c0_55, %c0_56, %c0_57] : memref<1x1x32xf32, #tpu.memory_space<vmem>>, vector<1x1x32xf32>
    %119 = vector.shape_cast %118 : vector<1x1x32xf32> to vector<1x32xf32>
    %c0_58 = arith.constant 0 : index
    %c0_59 = arith.constant 0 : index
    %c0_60 = arith.constant 0 : index
    %120 = vector.load %arg17[%c0_58, %c0_59, %c0_60] : memref<1x1x32xf32, #tpu.memory_space<vmem>>, vector<1x1x32xf32>
    %121 = vector.shape_cast %120 : vector<1x1x32xf32> to vector<1x32xf32>
    %cst_61 = arith.constant dense<0.000000e+00> : vector<8xf32>
    %122 = vector.multi_reduction <add>, %117, %cst_61 [1] : vector<8x32xf32> to vector<8xf32>
    %123 = vector.shape_cast %122 : vector<8xf32> to vector<8x1xf32>
    %cst_62 = arith.constant 3.200000e+01 : f32
    %124 = vector.broadcast %cst_62 : f32 to vector<8x1xf32>
    %125 = arith.divf %123, %124 : vector<8x1xf32>
    %126 = vector.broadcast %125 : vector<8x1xf32> to vector<8x32xf32>
    %127 = arith.subf %117, %126 : vector<8x32xf32>
    %128 = arith.mulf %127, %127 : vector<8x32xf32>
    %cst_63 = arith.constant dense<0.000000e+00> : vector<8xf32>
    %129 = vector.multi_reduction <add>, %128, %cst_63 [1] : vector<8x32xf32> to vector<8xf32>
    %130 = vector.shape_cast %129 : vector<8xf32> to vector<8x1xf32>
    %cst_64 = arith.constant 3.200000e+01 : f32
    %131 = vector.broadcast %cst_64 : f32 to vector<8x1xf32>
    %132 = arith.divf %130, %131 : vector<8x1xf32>
    %cst_65 = arith.constant 9.99999974E-6 : f32
    %133 = vector.broadcast %cst_65 : f32 to vector<8x1xf32>
    %134 = arith.addf %132, %133 : vector<8x1xf32>
    %135 = math.rsqrt %134 : vector<8x1xf32>
    %136 = vector.broadcast %135 : vector<8x1xf32> to vector<8x32xf32>
    %137 = arith.mulf %127, %136 : vector<8x32xf32>
    %138 = vector.broadcast %119 : vector<1x32xf32> to vector<8x32xf32>
    %139 = arith.mulf %137, %138 : vector<8x32xf32>
    %140 = vector.broadcast %121 : vector<1x32xf32> to vector<8x32xf32>
    %141 = arith.addf %139, %140 : vector<8x32xf32>
    %c0_66 = arith.constant 0 : index
    %c0_67 = arith.constant 0 : index
    %142 = vector.load %arg19[%c0_66, %c0_67] : memref<8x32xf32, #tpu.memory_space<vmem>>, vector<8x32xf32>
    tpu.vector_store %arg19[%c0_66, %c0_67], %141 {strides = array<i32>} : memref<8x32xf32, #tpu.memory_space<vmem>>, vector<8x32xf32>,
    %c0_68 = arith.constant 0 : index
    %c0_69 = arith.constant 0 : index
    %c0_70 = arith.constant 0 : index
    %143 = vector.load %arg18[%c0_68, %c0_69, %c0_70] : memref<1x8x32xf32, #tpu.memory_space<vmem>>, vector<1x8x32xf32>
    %144 = vector.shape_cast %143 : vector<1x8x32xf32> to vector<8x32xf32>
    %145 = vector.shape_cast %141 : vector<8x32xf32> to vector<1x8x32xf32>
    tpu.vector_store %arg18[%c0_68, %c0_69, %c0_70], %145 {strides = array<i32>} : memref<1x8x32xf32, #tpu.memory_space<vmem>>, vector<1x8x32xf32>,
    return
  }
  func.func @transform_0(%arg0: i32, %arg1: i32) -> (i32, i32, i32) {
    %c0_i32 = arith.constant 0 : i32
    %c0_i32_0 = arith.constant 0 : i32
    %c0_i32_1 = arith.constant 0 : i32
    return %arg0, %c0_i32, %c0_i32_0 : i32, i32, i32
  }
  func.func @transform_1(%arg0: i32, %arg1: i32) -> (i32, i32, i32) {
    %c0_i32 = arith.constant 0 : i32
    %c0_i32_0 = arith.constant 0 : i32
    %c0_i32_1 = arith.constant 0 : i32
    return %arg0, %c0_i32, %c0_i32_0 : i32, i32, i32
  }
  func.func @transform_2(%arg0: i32, %arg1: i32) -> (i32, i32, i32) {
    %c0_i32 = arith.constant 0 : i32
    %c0_i32_0 = arith.constant 0 : i32
    %c0_i32_1 = arith.constant 0 : i32
    return %arg1, %c0_i32, %c0_i32_0 : i32, i32, i32
  }
  func.func @transform_3(%arg0: i32, %arg1: i32) -> (i32, i32, i32) {
    %c0_i32 = arith.constant 0 : i32
    %c0_i32_0 = arith.constant 0 : i32
    %c0_i32_1 = arith.constant 0 : i32
    return %arg1, %c0_i32, %c0_i32_0 : i32, i32, i32
  }
  func.func @transform_4(%arg0: i32, %arg1: i32) -> (i32, i32, i32) {
    %c0_i32 = arith.constant 0 : i32
    %c0_i32_0 = arith.constant 0 : i32
    %c0_i32_1 = arith.constant 0 : i32
    return %arg1, %c0_i32, %c0_i32_0 : i32, i32, i32
  }
  func.func @transform_5(%arg0: i32, %arg1: i32) -> (i32, i32, i32) {
    %c0_i32 = arith.constant 0 : i32
    %c0_i32_0 = arith.constant 0 : i32
    %c0_i32_1 = arith.constant 0 : i32
    return %arg1, %c0_i32, %c0_i32_0 : i32, i32, i32
  }
  func.func @transform_6(%arg0: i32, %arg1: i32) -> (i32, i32, i32) {
    %c0_i32 = arith.constant 0 : i32
    %c0_i32_0 = arith.constant 0 : i32
    %c0_i32_1 = arith.constant 0 : i32
    return %arg1, %c0_i32, %c0_i32_0 : i32, i32, i32
  }
  func.func @transform_7(%arg0: i32, %arg1: i32) -> (i32, i32, i32) {
    %c0_i32 = arith.constant 0 : i32
    %c0_i32_0 = arith.constant 0 : i32
    %c0_i32_1 = arith.constant 0 : i32
    return %arg1, %c0_i32, %c0_i32_0 : i32, i32, i32
  }
  func.func @transform_8(%arg0: i32, %arg1: i32) -> (i32, i32, i32) {
    %c0_i32 = arith.constant 0 : i32
    %c0_i32_0 = arith.constant 0 : i32
    %c0_i32_1 = arith.constant 0 : i32
    return %arg1, %c0_i32, %c0_i32_0 : i32, i32, i32
  }
  func.func @transform_9(%arg0: i32, %arg1: i32) -> (i32, i32, i32) {
    %c0_i32 = arith.constant 0 : i32
    %c0_i32_0 = arith.constant 0 : i32
    %c0_i32_1 = arith.constant 0 : i32
    return %arg1, %c0_i32, %c0_i32_0 : i32, i32, i32
  }
  func.func @transform_10(%arg0: i32, %arg1: i32) -> (i32, i32, i32) {
    %c0_i32 = arith.constant 0 : i32
    %c0_i32_0 = arith.constant 0 : i32
    %c0_i32_1 = arith.constant 0 : i32
    return %arg1, %c0_i32, %c0_i32_0 : i32, i32, i32
  }
  func.func @transform_11(%arg0: i32, %arg1: i32) -> (i32, i32, i32) {
    %c0_i32 = arith.constant 0 : i32
    %c0_i32_0 = arith.constant 0 : i32
    %c0_i32_1 = arith.constant 0 : i32
    return %arg1, %c0_i32, %c0_i32_0 : i32, i32, i32
  }
  func.func @transform_12(%arg0: i32, %arg1: i32) -> (i32, i32, i32) {
    %c0_i32 = arith.constant 0 : i32
    %c0_i32_0 = arith.constant 0 : i32
    %c0_i32_1 = arith.constant 0 : i32
    return %arg1, %c0_i32, %c0_i32_0 : i32, i32, i32
  }
  func.func @transform_13(%arg0: i32, %arg1: i32) -> (i32, i32, i32) {
    %c0_i32 = arith.constant 0 : i32
    %c0_i32_0 = arith.constant 0 : i32
    %c0_i32_1 = arith.constant 0 : i32
    return %arg1, %c0_i32, %c0_i32_0 : i32, i32, i32
  }
  func.func @transform_14(%arg0: i32, %arg1: i32) -> (i32, i32, i32) {
    %c0_i32 = arith.constant 0 : i32
    %c0_i32_0 = arith.constant 0 : i32
    %c0_i32_1 = arith.constant 0 : i32
    return %arg1, %c0_i32, %c0_i32_0 : i32, i32, i32
  }
  func.func @transform_15(%arg0: i32, %arg1: i32) -> (i32, i32, i32) {
    %c0_i32 = arith.constant 0 : i32
    %c0_i32_0 = arith.constant 0 : i32
    %c0_i32_1 = arith.constant 0 : i32
    return %arg1, %c0_i32, %c0_i32_0 : i32, i32, i32
  }
  func.func @transform_16(%arg0: i32, %arg1: i32) -> (i32, i32, i32) {
    %c0_i32 = arith.constant 0 : i32
    %c0_i32_0 = arith.constant 0 : i32
    %c0_i32_1 = arith.constant 0 : i32
    return %arg0, %c0_i32, %c0_i32_0 : i32, i32, i32
  }
}

</mosaic_0001>

<llo_original>
// kernel: tpu_custom_call.1
$region0: #{tpu_custom_call.1}
  #allocation0 [shape = 'u32[]', space=smem, size = 0x4, offset = 0x4, fixed_abs, tag = 'smem constant byte address 0x4 - core index']
  #allocation1 [shape = 'u32[144,128]{1,0:T(1,128)}', space=vmem, size = 0x12000, scoped, tag = 'internal scratch']
  #allocation2 [shape = 'f32[8,32]{1,0:T(8,128)}', space=vmem, size = 0x1000, scoped, tag = 'scratch operand']
  %s0 = inlined_call_operand.hbm [shape: f32[2,8,32], index: 0, kind: input, shape index: {}]
  %s1 = inlined_call_operand.hbm [shape: f32[2,8,32], index: 1, kind: input, shape index: {}]
  %s2 = inlined_call_operand.vmem [shape: f32[2,32,64], index: 2, kind: input, shape index: {}]
  %s3 = inlined_call_operand.vmem [shape: f32[2,1,64], index: 3, kind: input, shape index: {}]
  %s4 = inlined_call_operand.vmem [shape: f32[2,32,32], index: 4, kind: input, shape index: {}]
  %s5 = inlined_call_operand.vmem [shape: f32[2,1,32], index: 5, kind: input, shape index: {}]
  %s6 = inlined_call_operand.vmem [shape: f32[2,32,32], index: 6, kind: input, shape index: {}]
  %s7 = inlined_call_operand.vmem [shape: f32[2,1,32], index: 7, kind: input, shape index: {}]
  %s8 = inlined_call_operand.hbm [shape: f32[2,32,64], index: 8, kind: input, shape index: {}]
  %s9 = inlined_call_operand.vmem [shape: f32[2,1,64], index: 9, kind: input, shape index: {}]
  %s10 = inlined_call_operand.vmem [shape: f32[2,64,32], index: 10, kind: input, shape index: {}]
  %s11 = inlined_call_operand.vmem [shape: f32[2,1,32], index: 11, kind: input, shape index: {}]
  %s12 = inlined_call_operand.vmem [shape: f32[2,1,32], index: 12, kind: input, shape index: {}]
  %s13 = inlined_call_operand.vmem [shape: f32[2,1,32], index: 13, kind: input, shape index: {}]
  %s14 = inlined_call_operand.vmem [shape: f32[2,1,32], index: 14, kind: input, shape index: {}]
  %s15 = inlined_call_operand.vmem [shape: f32[2,1,32], index: 15, kind: input, shape index: {}]
  %s16 = inlined_call_operand.hbm [shape: f32[2,8,32], index: 16, kind: output, shape index: {}]
  %s17 = sld [smem:[#allocation0]]
  $region113: #{tpu_custom_call.1} parent=0
    _
  %s19 = ssub.s32 1, %s17
  %s20 = scalar_select 0, %s19, %s17
  $region1: #{tpu_custom_call.1} parent=0
    #allocation3 [shape = 'u8[8192]{0}', space=vmem, size = 0x2000, scoped, tag = 'input window, operand 0']
    #allocation4 [shape = 's32[2]{0}', space=sflag, size = 0x8, scoped, tag = 'scoped memory for tpu_custom_call.1']
    #allocation5 [shape = 's32[2]{0}', space=sflag, size = 0x8, scoped, tag = 'scoped memory for tpu_custom_call.1']
    #allocation6 [shape = 'u8[8192]{0}', space=vmem, size = 0x2000, scoped, tag = 'input window, operand 1']
    #allocation7 [shape = 's32[2]{0}', space=sflag, size = 0x8, scoped, tag = 'scoped memory for tpu_custom_call.1']
    #allocation8 [shape = 'u8[32768]{0}', space=vmem, size = 0x8000, scoped, tag = 'input window, operand 8']
    #allocation9 [shape = 'u8[8192]{0}', space=vmem, size = 0x2000, scoped, tag = 'output window, operand 0']
    %21 = vsyncpa [#allocation4], 0
    %s22 = scalar_lea.sflag [#allocation4], 1
    %23 = vsyncpa %s22, 0
    %24 = vsyncpa [#allocation7], 0
    %s25 = scalar_lea.sflag [#allocation7], 1
    %26 = vsyncpa %s25, 0
    %27 = vsyncpa [#allocation5], 0
    %s28 = scalar_lea.sflag [#allocation5], 1
    %29 = vsyncpa %s28, 0
    loop: start=0, step=1, limit=6
    $region2: #{tpu_custom_call.1} parent=1 // loop_pre_header
      _
    $region3: #{tpu_custom_call.1} parent=1 // loop_header
      %s31 = sphi 0, %s35
      %p32 = scmp.ge.s32.totalorder %s31, 6
      %s38 = sphi 0, %s50
      %s39 = sphi 0, %s46
      %s40 = sphi 0, %s38
      %s41 = sphi 0, %s39
      %s42 = sphi 0, %s40
      %s43 = sphi 0, %s41
      %s53 = sphi 0, %s55
      %s56 = sphi 0, %s53
      %s57 = sphi 0, %s56
      %s73 = sphi 0, %s57
      %s79 = sphi 0, %s81
      %s82 = sphi 0, %s79
      %s83 = sphi 0, %s82
      %s99 = sphi 0, %s83
      %s105 = sphi 0, %s107
      %s108 = sphi 0, %s105
      %s109 = sphi 0, %s108
      %s125 = sphi 0, %s109
      %s131 = sphi 0, %s133
      %s134 = sphi 0, %s131
      %s135 = sphi 0, %s134
      %s151 = sphi 0, %s135
      %s157 = sphi 0, %s159
      %s160 = sphi 0, %s157
      %s161 = sphi 0, %s160
      %s177 = sphi 0, %s161
      %s183 = sphi 0, %s185
      %s186 = sphi 0, %s183
      %s187 = sphi 0, %s186
      %s203 = sphi 0, %s187
      %s209 = sphi 0, %s211
      %s212 = sphi 0, %s209
      %s213 = sphi 0, %s212
      %s229 = sphi 0, %s213
      %s235 = sphi 0, %s237
      %s238 = sphi 0, %s235
      %s239 = sphi 0, %s238
      %s255 = sphi 0, %s239
      %s261 = sphi 0, %s263
      %s264 = sphi 0, %s261
      %s265 = sphi 0, %s264
      %s281 = sphi 0, %s265
      %s287 = sphi 0, %s289
      %s290 = sphi 0, %s287
      %s291 = sphi 0, %s290
      %s307 = sphi 0, %s291
      %s313 = sphi 0, %s315
      %s316 = sphi 0, %s313
      %s317 = sphi 0, %s316
      %s333 = sphi 0, %s317
      %s339 = sphi 0, %s341
      %s342 = sphi 0, %s339
      %s343 = sphi 0, %s342
      %s359 = sphi 0, %s343
      %s365 = sphi 0, %s367
      %s368 = sphi 0, %s365
      %s369 = sphi 0, %s368
      %s385 = sphi 0, %s369
      %s391 = sphi 0, %s393
      %s394 = sphi 0, %s391
      %s395 = sphi 0, %s394
      %s411 = sphi 0, %s395
      %s417 = sphi 0, %s419
      %s420 = sphi 0, %s417
      %s421 = sphi 0, %s420
      %s437 = sphi 0, %s421
      %s443 = sphi 0, %s445
      %s446 = sphi 0, %s443
      %s447 = sphi 0, %s446
      %s463 = sphi 0, %s447
      %s469 = sphi 0, %s471
      %s472 = sphi 0, %s469
      %s473 = sphi 0, %s472
      %s489 = sphi 0, %s473
    $region4: #{tpu_custom_call.1} parent=1 // loop_header_branch
      %34 = sbr.rel (%p32) target = $region8
    $region5: #{tpu_custom_call.1} parent=1 // loop_body
      %s36 = ssub.s32 %s31, 1
      %s37 = ssub.s32 %s31, 2
      %s44 = sadd.s32 1, %s39
      %p45 = scmp.ge.s32.totalorder %s44, 2
      %s46 = scalar_select %p45, 0, %s44
      %s47 = sadd.s32 1, %s38
      %s48 = scalar_select %p45, %s47, %s38
      %p49 = scmp.ge.s32.totalorder %s48, 2
      %s50 = scalar_select %p49, 0, %s48
      %s51 = ssub.s32 %s38, %s50
      %p52 = scmp.eq.s32.totalorder %s51, 0
      %s54 = sadd.s32 %s53, 1
      %s55 = scalar_select %p52, %s53, %s54
      %p58 = pneg %p52
      %p59 = scmp.eq.s32.totalorder %s31, 3
      %p60 = por %p58, %p59
      %p61 = scmp.ne.s32.totalorder %s53, %s56
      %p62 = scmp.eq.s32.totalorder %s31, 0
      %p63 = por %p61, %p62
      %p64 = scmp.ne.s32.totalorder %s53, %s56
      %p65 = scmp.eq.s32.totalorder %s36, 3
      %p66 = por %p64, %p65
      %p67 = scmp.ne.s32.totalorder %s56, %s57
      %p68 = scmp.eq.s32.totalorder %s36, 0
      %p69 = por %p67, %p68
      %p70 = scmp.ne.s32.totalorder %s56, %s57
      %p71 = scmp.eq.s32.totalorder %s37, 3
      %p72 = por %p70, %p71
      %p74 = scmp.ne.s32.totalorder %s57, %s73
      %p75 = scmp.eq.s32.totalorder %s37, 0
      %p76 = por %p74, %p75
      %s77 = ssub.s32 %s38, %s50
      %p78 = scmp.eq.s32.totalorder %s77, 0
      %s80 = sadd.s32 %s79, 1
      %s81 = scalar_select %p78, %s79, %s80
      %p84 = pneg %p78
      %p85 = scmp.eq.s32.totalorder %s31, 3
      %p86 = por %p84, %p85
      %p87 = scmp.ne.s32.totalorder %s79, %s82
      %p88 = scmp.eq.s32.totalorder %s31, 0
      %p89 = por %p87, %p88
      %p90 = scmp.ne.s32.totalorder %s79, %s82
      %p91 = scmp.eq.s32.totalorder %s36, 3
      %p92 = por %p90, %p91
      %p93 = scmp.ne.s32.totalorder %s82, %s83
      %p94 = scmp.eq.s32.totalorder %s36, 0
      %p95 = por %p93, %p94
      %p96 = scmp.ne.s32.totalorder %s82, %s83
      %p97 = scmp.eq.s32.totalorder %s37, 3
      %p98 = por %p96, %p97
      %p100 = scmp.ne.s32.totalorder %s83, %s99
      %p101 = scmp.eq.s32.totalorder %s37, 0
      %p102 = por %p100, %p101
      %s103 = ssub.s32 %s39, %s46
      %p104 = scmp.eq.s32.totalorder %s103, 0
      %s106 = sadd.s32 %s105, 1
      %s107 = scalar_select %p104, %s105, %s106
      %p110 = pneg %p104
      %p111 = scmp.eq.s32.totalorder %s31, 3
      %p112 = por %p110, %p111
      %p113 = scmp.ne.s32.totalorder %s105, %s108
      %p114 = scmp.eq.s32.totalorder %s31, 0
      %p115 = por %p113, %p114
      %p116 = scmp.ne.s32.totalorder %s105, %s108
      %p117 = scmp.eq.s32.totalorder %s36, 3
      %p118 = por %p116, %p117
      %p119 = scmp.ne.s32.totalorder %s108, %s109
      %p120 = scmp.eq.s32.totalorder %s36, 0
      %p121 = por %p119, %p120
      %p122 = scmp.ne.s32.totalorder %s108, %s109
      %p123 = scmp.eq.s32.totalorder %s37, 3
      %p124 = por %p122, %p123
      %p126 = scmp.ne.s32.totalorder %s109, %s125
      %p127 = scmp.eq.s32.totalorder %s37, 0
      %p128 = por %p126, %p127
      %s129 = ssub.s32 %s39, %s46
      %p130 = scmp.eq.s32.totalorder %s129, 0
      %s132 = sadd.s32 %s131, 1
      %s133 = scalar_select %p130, %s131, %s132
      %p136 = pneg %p130
      %p137 = scmp.eq.s32.totalorder %s31, 3
      %p138 = por %p136, %p137
      %p139 = scmp.ne.s32.totalorder %s131, %s134
      %p140 = scmp.eq.s32.totalorder %s31, 0
      %p141 = por %p139, %p140
      %p142 = scmp.ne.s32.totalorder %s131, %s134
      %p143 = scmp.eq.s32.totalorder %s36, 3
      %p144 = por %p142, %p143
      %p145 = scmp.ne.s32.totalorder %s134, %s135
      %p146 = scmp.eq.s32.totalorder %s36, 0
      %p147 = por %p145, %p146
      %p148 = scmp.ne.s32.totalorder %s134, %s135
      %p149 = scmp.eq.s32.totalorder %s37, 3
      %p150 = por %p148, %p149
      %p152 = scmp.ne.s32.totalorder %s135, %s151
      %p153 = scmp.eq.s32.totalorder %s37, 0
      %p154 = por %p152, %p153
      %s155 = ssub.s32 %s39, %s46
      %p156 = scmp.eq.s32.totalorder %s155, 0
      %s158 = sadd.s32 %s157, 1
      %s159 = scalar_select %p156, %s157, %s158
      %p162 = pneg %p156
      %p163 = scmp.eq.s32.totalorder %s31, 3
      %p164 = por %p162, %p163
      %p165 = scmp.ne.s32.totalorder %s157, %s160
      %p166 = scmp.eq.s32.totalorder %s31, 0
      %p167 = por %p165, %p166
      %p168 = scmp.ne.s32.totalorder %s157, %s160
      %p169 = scmp.eq.s32.totalorder %s36, 3
      %p170 = por %p168, %p169
      %p171 = scmp.ne.s32.totalorder %s160, %s161
      %p172 = scmp.eq.s32.totalorder %s36, 0
      %p173 = por %p171, %p172
      %p174 = scmp.ne.s32.totalorder %s160, %s161
      %p175 = scmp.eq.s32.totalorder %s37, 3
      %p176 = por %p174, %p175
      %p178 = scmp.ne.s32.totalorder %s161, %s177
      %p179 = scmp.eq.s32.totalorder %s37, 0
      %p180 = por %p178, %p179
      %s181 = ssub.s32 %s39, %s46
      %p182 = scmp.eq.s32.totalorder %s181, 0
      %s184 = sadd.s32 %s183, 1
      %s185 = scalar_select %p182, %s183, %s184
      %p188 = pneg %p182
      %p189 = scmp.eq.s32.totalorder %s31, 3
      %p190 = por %p188, %p189
      %p191 = scmp.ne.s32.totalorder %s183, %s186
      %p192 = scmp.eq.s32.totalorder %s31, 0
      %p193 = por %p191, %p192
      %p194 = scmp.ne.s32.totalorder %s183, %s186
      %p195 = scmp.eq.s32.totalorder %s36, 3
      %p196 = por %p194, %p195
      %p197 = scmp.ne.s32.totalorder %s186, %s187
      %p198 = scmp.eq.s32.totalorder %s36, 0
      %p199 = por %p197, %p198
      %p200 = scmp.ne.s32.totalorder %s186, %s187
      %p201 = scmp.eq.s32.totalorder %s37, 3
      %p202 = por %p200, %p201
      %p204 = scmp.ne.s32.totalorder %s187, %s203
      %p205 = scmp.eq.s32.totalorder %s37, 0
      %p206 = por %p204, %p205
      %s207 = ssub.s32 %s39, %s46
      %p208 = scmp.eq.s32.totalorder %s207, 0
      %s210 = sadd.s32 %s209, 1
      %s211 = scalar_select %p208, %s209, %s210
      %p214 = pneg %p208
      %p215 = scmp.eq.s32.totalorder %s31, 3
      %p216 = por %p214, %p215
      %p217 = scmp.ne.s32.totalorder %s209, %s212
      %p218 = scmp.eq.s32.totalorder %s31, 0
      %p219 = por %p217, %p218
      %p220 = scmp.ne.s32.totalorder %s209, %s212
      %p221 = scmp.eq.s32.totalorder %s36, 3
      %p222 = por %p220, %p221
      %p223 = scmp.ne.s32.totalorder %s212, %s213
      %p224 = scmp.eq.s32.totalorder %s36, 0
      %p225 = por %p223, %p224
      %p226 = scmp.ne.s32.totalorder %s212, %s213
      %p227 = scmp.eq.s32.totalorder %s37, 3
      %p228 = por %p226, %p227
      %p230 = scmp.ne.s32.totalorder %s213, %s229
      %p231 = scmp.eq.s32.totalorder %s37, 0
      %p232 = por %p230, %p231
      %s233 = ssub.s32 %s39, %s46
      %p234 = scmp.eq.s32.totalorder %s233, 0
      %s236 = sadd.s32 %s235, 1
      %s237 = scalar_select %p234, %s235, %s236
      %p240 = pneg %p234
      %p241 = scmp.eq.s32.totalorder %s31, 3
      %p242 = por %p240, %p241
      %p243 = scmp.ne.s32.totalorder %s235, %s238
      %p244 = scmp.eq.s32.totalorder %s31, 0
      %p245 = por %p243, %p244
      %p246 = scmp.ne.s32.totalorder %s235, %s238
      %p247 = scmp.eq.s32.totalorder %s36, 3
      %p248 = por %p246, %p247
      %p249 = scmp.ne.s32.totalorder %s238, %s239
      %p250 = scmp.eq.s32.totalorder %s36, 0
      %p251 = por %p249, %p250
      %p252 = scmp.ne.s32.totalorder %s238, %s239
      %p253 = scmp.eq.s32.totalorder %s37, 3
      %p254 = por %p252, %p253
      %p256 = scmp.ne.s32.totalorder %s239, %s255
      %p257 = scmp.eq.s32.totalorder %s37, 0
      %p258 = por %p256, %p257
      %s259 = ssub.s32 %s39, %s46
      %p260 = scmp.eq.s32.totalorder %s259, 0
      %s262 = sadd.s32 %s261, 1
      %s263 = scalar_select %p260, %s261, %s262
      %p266 = pneg %p260
      %p267 = scmp.eq.s32.totalorder %s31, 3
      %p268 = por %p266, %p267
      %p269 = scmp.ne.s32.totalorder %s261, %s264
      %p270 = scmp.eq.s32.totalorder %s31, 0
      %p271 = por %p269, %p270
      %p272 = scmp.ne.s32.totalorder %s261, %s264
      %p273 = scmp.eq.s32.totalorder %s36, 3
      %p274 = por %p272, %p273
      %p275 = scmp.ne.s32.totalorder %s264, %s265
      %p276 = scmp.eq.s32.totalorder %s36, 0
      %p277 = por %p275, %p276
      %p278 = scmp.ne.s32.totalorder %s264, %s265
      %p279 = scmp.eq.s32.totalorder %s37, 3
      %p280 = por %p278, %p279
      %p282 = scmp.ne.s32.totalorder %s265, %s281
      %p283 = scmp.eq.s32.totalorder %s37, 0
      %p284 = por %p282, %p283
      %s285 = ssub.s32 %s39, %s46
      %p286 = scmp.eq.s32.totalorder %s285, 0
      %s288 = sadd.s32 %s287, 1
      %s289 = scalar_select %p286, %s287, %s288
      %p292 = pneg %p286
      %p293 = scmp.eq.s32.totalorder %s31, 3
      %p294 = por %p292, %p293
      %p295 = scmp.ne.s32.totalorder %s287, %s290
      %p296 = scmp.eq.s32.totalorder %s31, 0
      %p297 = por %p295, %p296
      %p298 = scmp.ne.s32.totalorder %s287, %s290
      %p299 = scmp.eq.s32.totalorder %s36, 3
      %p300 = por %p298, %p299
      %p301 = scmp.ne.s32.totalorder %s290, %s291
      %p302 = scmp.eq.s32.totalorder %s36, 0
      %p303 = por %p301, %p302
      %p304 = scmp.ne.s32.totalorder %s290, %s291
      %p305 = scmp.eq.s32.totalorder %s37, 3
      %p306 = por %p304, %p305
      %p308 = scmp.ne.s32.totalorder %s291, %s307
      %p309 = scmp.eq.s32.totalorder %s37, 0
      %p310 = por %p308, %p309
      %s311 = ssub.s32 %s39, %s46
      %p312 = scmp.eq.s32.totalorder %s311, 0
      %s314 = sadd.s32 %s313, 1
      %s315 = scalar_select %p312, %s313, %s314
      %p318 = pneg %p312
      %p319 = scmp.eq.s32.totalorder %s31, 3
      %p320 = por %p318, %p319
      %p321 = scmp.ne.s32.totalorder %s313, %s316
      %p322 = scmp.eq.s32.totalorder %s31, 0
      %p323 = por %p321, %p322
      %p324 = scmp.ne.s32.totalorder %s313, %s316
      %p325 = scmp.eq.s32.totalorder %s36, 3
      %p326 = por %p324, %p325
      %p327 = scmp.ne.s32.totalorder %s316, %s317
      %p328 = scmp.eq.s32.totalorder %s36, 0
      %p329 = por %p327, %p328
      %p330 = scmp.ne.s32.totalorder %s316, %s317
      %p331 = scmp.eq.s32.totalorder %s37, 3
      %p332 = por %p330, %p331
      %p334 = scmp.ne.s32.totalorder %s317, %s333
      %p335 = scmp.eq.s32.totalorder %s37, 0
      %p336 = por %p334, %p335
      %s337 = ssub.s32 %s39, %s46
      %p338 = scmp.eq.s32.totalorder %s337, 0
      %s340 = sadd.s32 %s339, 1
      %s341 = scalar_select %p338, %s339, %s340
      %p344 = pneg %p338
      %p345 = scmp.eq.s32.totalorder %s31, 3
      %p346 = por %p344, %p345
      %p347 = scmp.ne.s32.totalorder %s339, %s342
      %p348 = scmp.eq.s32.totalorder %s31, 0
      %p349 = por %p347, %p348
      %p350 = scmp.ne.s32.totalorder %s339, %s342
      %p351 = scmp.eq.s32.totalorder %s36, 3
      %p352 = por %p350, %p351
      %p353 = scmp.ne.s32.totalorder %s342, %s343
      %p354 = scmp.eq.s32.totalorder %s36, 0
      %p355 = por %p353, %p354
      %p356 = scmp.ne.s32.totalorder %s342, %s343
      %p357 = scmp.eq.s32.totalorder %s37, 3
      %p358 = por %p356, %p357
      %p360 = scmp.ne.s32.totalorder %s343, %s359
      %p361 = scmp.eq.s32.totalorder %s37, 0
      %p362 = por %p360, %p361
      %s363 = ssub.s32 %s39, %s46
      %p364 = scmp.eq.s32.totalorder %s363, 0
      %s366 = sadd.s32 %s365, 1
      %s367 = scalar_select %p364, %s365, %s366
      %p370 = pneg %p364
      %p371 = scmp.eq.s32.totalorder %s31, 3
      %p372 = por %p370, %p371
      %p373 = scmp.ne.s32.totalorder %s365, %s368
      %p374 = scmp.eq.s32.totalorder %s31, 0
      %p375 = por %p373, %p374
      %p376 = scmp.ne.s32.totalorder %s365, %s368
      %p377 = scmp.eq.s32.totalorder %s36, 3
      %p378 = por %p376, %p377
      %p379 = scmp.ne.s32.totalorder %s368, %s369
      %p380 = scmp.eq.s32.totalorder %s36, 0
      %p381 = por %p379, %p380
      %p382 = scmp.ne.s32.totalorder %s368, %s369
      %p383 = scmp.eq.s32.totalorder %s37, 3
      %p384 = por %p382, %p383
      %p386 = scmp.ne.s32.totalorder %s369, %s385
      %p387 = scmp.eq.s32.totalorder %s37, 0
      %p388 = por %p386, %p387
      %s389 = ssub.s32 %s39, %s46
      %p390 = scmp.eq.s32.totalorder %s389, 0
      %s392 = sadd.s32 %s391, 1
      %s393 = scalar_select %p390, %s391, %s392
      %p396 = pneg %p390
      %p397 = scmp.eq.s32.totalorder %s31, 3
      %p398 = por %p396, %p397
      %p399 = scmp.ne.s32.totalorder %s391, %s394
      %p400 = scmp.eq.s32.totalorder %s31, 0
      %p401 = por %p399, %p400
      %p402 = scmp.ne.s32.totalorder %s391, %s394
      %p403 = scmp.eq.s32.totalorder %s36, 3
      %p404 = por %p402, %p403
      %p405 = scmp.ne.s32.totalorder %s394, %s395
      %p406 = scmp.eq.s32.totalorder %s36, 0
      %p407 = por %p405, %p406
      %p408 = scmp.ne.s32.totalorder %s394, %s395
      %p409 = scmp.eq.s32.totalorder %s37, 3
      %p410 = por %p408, %p409
      %p412 = scmp.ne.s32.totalorder %s395, %s411
      %p413 = scmp.eq.s32.totalorder %s37, 0
      %p414 = por %p412, %p413
      %s415 = ssub.s32 %s39, %s46
      %p416 = scmp.eq.s32.totalorder %s415, 0
      %s418 = sadd.s32 %s417, 1
      %s419 = scalar_select %p416, %s417, %s418
      %p422 = pneg %p416
      %p423 = scmp.eq.s32.totalorder %s31, 3
      %p424 = por %p422, %p423
      %p425 = scmp.ne.s32.totalorder %s417, %s420
      %p426 = scmp.eq.s32.totalorder %s31, 0
      %p427 = por %p425, %p426
      %p428 = scmp.ne.s32.totalorder %s417, %s420
      %p429 = scmp.eq.s32.totalorder %s36, 3
      %p430 = por %p428, %p429
      %p431 = scmp.ne.s32.totalorder %s420, %s421
      %p432 = scmp.eq.s32.totalorder %s36, 0
      %p433 = por %p431, %p432
      %p434 = scmp.ne.s32.totalorder %s420, %s421
      %p435 = scmp.eq.s32.totalorder %s37, 3
      %p436 = por %p434, %p435
      %p438 = scmp.ne.s32.totalorder %s421, %s437
      %p439 = scmp.eq.s32.totalorder %s37, 0
      %p440 = por %p438, %p439
      %s441 = ssub.s32 %s39, %s46
      %p442 = scmp.eq.s32.totalorder %s441, 0
      %s444 = sadd.s32 %s443, 1
      %s445 = scalar_select %p442, %s443, %s444
      %p448 = pneg %p442
      %p449 = scmp.eq.s32.totalorder %s31, 3
      %p450 = por %p448, %p449
      %p451 = scmp.ne.s32.totalorder %s443, %s446
      %p452 = scmp.eq.s32.totalorder %s31, 0
      %p453 = por %p451, %p452
      %p454 = scmp.ne.s32.totalorder %s443, %s446
      %p455 = scmp.eq.s32.totalorder %s36, 3
      %p456 = por %p454, %p455
      %p457 = scmp.ne.s32.totalorder %s446, %s447
      %p458 = scmp.eq.s32.totalorder %s36, 0
      %p459 = por %p457, %p458
      %p460 = scmp.ne.s32.totalorder %s446, %s447
      %p461 = scmp.eq.s32.totalorder %s37, 3
      %p462 = por %p460, %p461
      %p464 = scmp.ne.s32.totalorder %s447, %s463
      %p465 = scmp.eq.s32.totalorder %s37, 0
      %p466 = por %p464, %p465
      %s467 = ssub.s32 %s38, %s50
      %p468 = scmp.eq.s32.totalorder %s467, 0
      %s470 = sadd.s32 %s469, 1
      %s471 = scalar_select %p468, %s469, %s470
      %p474 = pneg %p468
      %p475 = scmp.eq.s32.totalorder %s31, 3
      %p476 = por %p474, %p475
      %p477 = scmp.ne.s32.totalorder %s469, %s472
      %p478 = scmp.eq.s32.totalorder %s31, 0
      %p479 = por %p477, %p478
      %p480 = scmp.ne.s32.totalorder %s469, %s472
      %p481 = scmp.eq.s32.totalorder %s36, 3
      %p482 = por %p480, %p481
      %p483 = scmp.ne.s32.totalorder %s472, %s473
      %p484 = scmp.eq.s32.totalorder %s36, 0
      %p485 = por %p483, %p484
      %p486 = scmp.ne.s32.totalorder %s472, %s473
      %p487 = scmp.eq.s32.totalorder %s37, 3
      %p488 = por %p486, %p487
      %p490 = scmp.ne.s32.totalorder %s473, %s489
      %p491 = scmp.eq.s32.totalorder %s37, 0
      %p492 = por %p490, %p491
      %p493 = scmp.le.s32.totalorder 1, %s31
      %p494 = scmp.lt.s32.totalorder %s31, 5
      %p495 = pnand %p493, %p494
      %p496 = pneg %p495
      // Predicated region
      $region9: #{tpu_custom_call.1} parent=5 // pred_check
        _
      $region10: #{tpu_custom_call.1} parent=5 // pred_check_branch
        %498 = sbr.rel (%p495) target = $region12
      $region11: #{tpu_custom_call.1} parent=5 // pred_region
        %s499 = ssub.s32 %s31, 1
      $region12: #{tpu_custom_call.1} parent=5 // pred_fallthru
        _
      %p500 = scmp.lt.s32.totalorder %s31, 4
      // Predicated region
      $region13: #{tpu_custom_call.1} parent=5 // pred_check
        %p501 = pneg %p500
      $region14: #{tpu_custom_call.1} parent=5 // pred_check_branch
        %503 = sbr.rel (%p501) target = $region16
      $region15: #{tpu_custom_call.1} parent=5 // pred_region
        // Predicated region
        $region17: #{tpu_custom_call.1} parent=15 // pred_check
          %p504 = pneg %p63
        $region18: #{tpu_custom_call.1} parent=15 // pred_check_branch
          %506 = sbr.rel (%p504) target = $region20
        $region19: #{tpu_custom_call.1} parent=15 // pred_region
          %s507 = sand.u32 %s53, 1
          %s508 = scalar_lea.sflag [#allocation4], %s507
          %s509 = sand.u32 %s53, 1
          %s510 = smul.addr %s509, 8
          %s511 = scalar_lea.vmem [#allocation3], %s510
          %s513 = ssub.s32 128, 128
          %514 = vsyncadd %s508, %s513
          %s515 = smul.addr %s38, 128
          %s516 = scalar_lea.hbm %s0, %s515
          %s518 = sshll.u32 %s511, 4
          %s519 = int_to_ptr.vmem [resolvable:$true] %s518
          %521 = dma.hbm_to_vmem [thread:$0]  %s516, 128, %s519, %s508
        $region20: #{tpu_custom_call.1} parent=15 // pred_fallthru
          _
        // Predicated region
        $region21: #{tpu_custom_call.1} parent=15 // pred_check
          %p522 = pneg %p89
        $region22: #{tpu_custom_call.1} parent=15 // pred_check_branch
          %524 = sbr.rel (%p522) target = $region24
        $region23: #{tpu_custom_call.1} parent=15 // pred_region
          %s525 = sand.u32 %s31, 1
          %s526 = scalar_lea.sflag [#allocation7], %s525
          %s527 = sand.u32 %s79, 1
          %s528 = smul.addr %s527, 8
          %s529 = scalar_lea.vmem [#allocation6], %s528
          %s531 = ssub.s32 128, 128
          %532 = vsyncadd %s526, %s531
          %s533 = smul.addr %s38, 128
          %s534 = scalar_lea.hbm %s1, %s533
          %s536 = sshll.u32 %s529, 4
          %s537 = int_to_ptr.vmem [resolvable:$true] %s536
          %539 = dma.hbm_to_vmem [thread:$0]  %s534, 128, %s537, %s526
        $region24: #{tpu_custom_call.1} parent=15 // pred_fallthru
          _
        // Predicated region
        $region25: #{tpu_custom_call.1} parent=15 // pred_check
          %p540 = pneg %p115
        $region26: #{tpu_custom_call.1} parent=15 // pred_check_branch
          %542 = sbr.rel (%p540) target = $region28
        $region27: #{tpu_custom_call.1} parent=15 // pred_region
          %p543 = scmp.lt.s32.totalorder %s39, 1
          %s544 = scalar_select %p543, %s39, 1
          %s545 = smul.addr %s544, 4
          %s546 = smul.addr %s545, 8
          %s547 = scalar_lea.vmem %s2, %s546
        $region28: #{tpu_custom_call.1} parent=15 // pred_fallthru
          _
        // Predicated region
        $region29: #{tpu_custom_call.1} parent=15 // pred_check
          %p548 = pneg %p141
        $region30: #{tpu_custom_call.1} parent=15 // pred_check_branch
          %550 = sbr.rel (%p548) target = $region32
        $region31: #{tpu_custom_call.1} parent=15 // pred_region
          %p551 = scmp.lt.s32.totalorder %s39, 1
          %s552 = scalar_select %p551, %s39, 1
          %s553 = scalar_lea.vmem %s3, %s552
        $region32: #{tpu_custom_call.1} parent=15 // pred_fallthru
          _
        // Predicated region
        $region33: #{tpu_custom_call.1} parent=15 // pred_check
          %p554 = pneg %p167
        $region34: #{tpu_custom_call.1} parent=15 // pred_check_branch
          %556 = sbr.rel (%p554) target = $region36
        $region35: #{tpu_custom_call.1} parent=15 // pred_region
          %p557 = scmp.lt.s32.totalorder %s39, 1
          %s558 = scalar_select %p557, %s39, 1
          %s559 = smul.addr %s558, 4
          %s560 = smul.addr %s559, 8
          %s561 = scalar_lea.vmem %s4, %s560
        $region36: #{tpu_custom_call.1} parent=15 // pred_fallthru
          _
        // Predicated region
        $region37: #{tpu_custom_call.1} parent=15 // pred_check
          %p562 = pneg %p193
        $region38: #{tpu_custom_call.1} parent=15 // pred_check_branch
          %564 = sbr.rel (%p562) target = $region40
        $region39: #{tpu_custom_call.1} parent=15 // pred_region
          %p565 = scmp.lt.s32.totalorder %s39, 1
          %s566 = scalar_select %p565, %s39, 1
          %s567 = scalar_lea.vmem %s5, %s566
        $region40: #{tpu_custom_call.1} parent=15 // pred_fallthru
          _
        // Predicated region
        $region41: #{tpu_custom_call.1} parent=15 // pred_check
          %p568 = pneg %p219
        $region42: #{tpu_custom_call.1} parent=15 // pred_check_branch
          %570 = sbr.rel (%p568) target = $region44
        $region43: #{tpu_custom_call.1} parent=15 // pred_region
          %p571 = scmp.lt.s32.totalorder %s39, 1
          %s572 = scalar_select %p571, %s39, 1
          %s573 = smul.addr %s572, 4
          %s574 = smul.addr %s573, 8
          %s575 = scalar_lea.vmem %s6, %s574
        $region44: #{tpu_custom_call.1} parent=15 // pred_fallthru
          _
        // Predicated region
        $region45: #{tpu_custom_call.1} parent=15 // pred_check
          %p576 = pneg %p245
        $region46: #{tpu_custom_call.1} parent=15 // pred_check_branch
          %578 = sbr.rel (%p576) target = $region48
        $region47: #{tpu_custom_call.1} parent=15 // pred_region
          %p579 = scmp.lt.s32.totalorder %s39, 1
          %s580 = scalar_select %p579, %s39, 1
          %s581 = scalar_lea.vmem %s7, %s580
        $region48: #{tpu_custom_call.1} parent=15 // pred_fallthru
          _
        // Predicated region
        $region49: #{tpu_custom_call.1} parent=15 // pred_check
          %p582 = pneg %p271
        $region50: #{tpu_custom_call.1} parent=15 // pred_check_branch
          %584 = sbr.rel (%p582) target = $region52
        $region51: #{tpu_custom_call.1} parent=15 // pred_region
          %s585 = sand.u32 %s31, 1
          %s586 = scalar_lea.sflag [#allocation7], %s585
          %s587 = sand.u32 %s261, 1
          %s588 = smul.addr %s587, 32
          %s589 = scalar_lea.vmem [#allocation8], %s588
          %s591 = ssub.s32 512, 512
          %592 = vsyncadd %s586, %s591
          %s593 = smul.addr %s39, 4
          %s594 = smul.addr %s593, 128
          %s595 = scalar_lea.hbm %s8, %s594
          %s596 = sshll.u32 %s589, 4
          %s597 = int_to_ptr.vmem [resolvable:$true] %s596
          %602 = dma.hbm_to_vmem [thread:$0]  %s595, 512, %s597, %s586, 128, 128, 8
        $region52: #{tpu_custom_call.1} parent=15 // pred_fallthru
          _
        // Predicated region
        $region53: #{tpu_custom_call.1} parent=15 // pred_check
          %p603 = pneg %p297
        $region54: #{tpu_custom_call.1} parent=15 // pred_check_branch
          %605 = sbr.rel (%p603) target = $region56
        $region55: #{tpu_custom_call.1} parent=15 // pred_region
          %p606 = scmp.lt.s32.totalorder %s39, 1
          %s607 = scalar_select %p606, %s39, 1
          %s608 = scalar_lea.vmem %s9, %s607
        $region56: #{tpu_custom_call.1} parent=15 // pred_fallthru
          _
        // Predicated region
        $region57: #{tpu_custom_call.1} parent=15 // pred_check
          %p609 = pneg %p323
        $region58: #{tpu_custom_call.1} parent=15 // pred_check_branch
          %611 = sbr.rel (%p609) target = $region60
        $region59: #{tpu_custom_call.1} parent=15 // pred_region
          %p612 = scmp.lt.s32.totalorder %s39, 1
          %s613 = scalar_select %p612, %s39, 1
          %s614 = smul.addr %s613, 8
          %s615 = smul.addr %s614, 8
          %s616 = scalar_lea.vmem %s10, %s615
        $region60: #{tpu_custom_call.1} parent=15 // pred_fallthru
          _
        // Predicated region
        $region61: #{tpu_custom_call.1} parent=15 // pred_check
          %p617 = pneg %p349
        $region62: #{tpu_custom_call.1} parent=15 // pred_check_branch
          %619 = sbr.rel (%p617) target = $region64
        $region63: #{tpu_custom_call.1} parent=15 // pred_region
          %p620 = scmp.lt.s32.totalorder %s39, 1
          %s621 = scalar_select %p620, %s39, 1
          %s622 = scalar_lea.vmem %s11, %s621
        $region64: #{tpu_custom_call.1} parent=15 // pred_fallthru
          _
        // Predicated region
        $region65: #{tpu_custom_call.1} parent=15 // pred_check
          %p623 = pneg %p375
        $region66: #{tpu_custom_call.1} parent=15 // pred_check_branch
          %625 = sbr.rel (%p623) target = $region68
        $region67: #{tpu_custom_call.1} parent=15 // pred_region
          %p626 = scmp.lt.s32.totalorder %s39, 1
          %s627 = scalar_select %p626, %s39, 1
          %s628 = scalar_lea.vmem %s12, %s627
        $region68: #{tpu_custom_call.1} parent=15 // pred_fallthru
          _
        // Predicated region
        $region69: #{tpu_custom_call.1} parent=15 // pred_check
          %p629 = pneg %p401
        $region70: #{tpu_custom_call.1} parent=15 // pred_check_branch
          %631 = sbr.rel (%p629) target = $region72
        $region71: #{tpu_custom_call.1} parent=15 // pred_region
          %p632 = scmp.lt.s32.totalorder %s39, 1
          %s633 = scalar_select %p632, %s39, 1
          %s634 = scalar_lea.vmem %s13, %s633
        $region72: #{tpu_custom_call.1} parent=15 // pred_fallthru
          _
        // Predicated region
        $region73: #{tpu_custom_call.1} parent=15 // pred_check
          %p635 = pneg %p427
        $region74: #{tpu_custom_call.1} parent=15 // pred_check_branch
          %637 = sbr.rel (%p635) target = $region76
        $region75: #{tpu_custom_call.1} parent=15 // pred_region
          %p638 = scmp.lt.s32.totalorder %s39, 1
          %s639 = scalar_select %p638, %s39, 1
          %s640 = scalar_lea.vmem %s14, %s639
        $region76: #{tpu_custom_call.1} parent=15 // pred_fallthru
          _
        // Predicated region
        $region77: #{tpu_custom_call.1} parent=15 // pred_check
          %p641 = pneg %p453
        $region78: #{tpu_custom_call.1} parent=15 // pred_check_branch
          %643 = sbr.rel (%p641) target = $region80
        $region79: #{tpu_custom_call.1} parent=15 // pred_region
          %p644 = scmp.lt.s32.totalorder %s39, 1
          %s645 = scalar_select %p644, %s39, 1
          %s646 = scalar_lea.vmem %s15, %s645
        $region80: #{tpu_custom_call.1} parent=15 // pred_fallthru
          _
      $region16: #{tpu_custom_call.1} parent=5 // pred_fallthru
        _
      %p647 = scmp.le.s32.totalorder 1, %s31
      %p648 = scmp.lt.s32.totalorder %s31, 5
      %p649 = pnand %p647, %p648
      %p650 = pneg %p649
      // Predicated region
      $region81: #{tpu_custom_call.1} parent=5 // pred_check
        _
      $region82: #{tpu_custom_call.1} parent=5 // pred_check_branch
        %652 = sbr.rel (%p649) target = $region84
      $region83: #{tpu_custom_call.1} parent=5 // pred_region
        %s653 = ssub.s32 %s31, 1
        %s654 = sand.u32 %s56, 1
        %s655 = scalar_lea.sflag [#allocation4], %s654
        %s656 = sand.u32 %s56, 1
        %s657 = smul.addr %s656, 8
        %s658 = scalar_lea.vmem [#allocation3], %s657
        // Predicated region
        $region85: #{tpu_custom_call.1} parent=83 // pred_check
          %p659 = pneg %p69
        $region86: #{tpu_custom_call.1} parent=83 // pred_check_branch
          %661 = sbr.rel (%p659) target = $region88
        $region87: #{tpu_custom_call.1} parent=83 // pred_region
          %662 = dma.done %s655, 128
        $region88: #{tpu_custom_call.1} parent=83 // pred_fallthru
          _
        %s663 = sand.u32 %s36, 1
        %s664 = scalar_lea.sflag [#allocation7], %s663
        %s665 = sand.u32 %s82, 1
        %s666 = smul.addr %s665, 8
        %s667 = scalar_lea.vmem [#allocation6], %s666
        // Predicated region
        $region89: #{tpu_custom_call.1} parent=83 // pred_check
          %p668 = pneg %p95
        $region90: #{tpu_custom_call.1} parent=83 // pred_check_branch
          %670 = sbr.rel (%p668) target = $region92
        $region91: #{tpu_custom_call.1} parent=83 // pred_region
          %671 = dma.done %s664, 128
        $region92: #{tpu_custom_call.1} parent=83 // pred_fallthru
          _
        %s672 = sand.u32 %s36, 1
        %s673 = scalar_lea.sflag [#allocation7], %s672
        %s674 = sand.u32 %s264, 1
        %s675 = smul.addr %s674, 32
        %s676 = scalar_lea.vmem [#allocation8], %s675
        // Predicated region
        $region93: #{tpu_custom_call.1} parent=83 // pred_check
          %p677 = pneg %p277
        $region94: #{tpu_custom_call.1} parent=83 // pred_check_branch
          %679 = sbr.rel (%p677) target = $region96
        $region95: #{tpu_custom_call.1} parent=83 // pred_region
          %680 = dma.done %s673, 512
        $region96: #{tpu_custom_call.1} parent=83 // pred_fallthru
          _
        %s681 = sand.u32 %s56, 1
        %s682 = scalar_lea.sflag [#allocation4], %s681
        %s683 = sand.u32 %s56, 1
        %s684 = smul.addr %s683, 8
        %s685 = scalar_lea.vmem [#allocation3], %s684
        %p686 = pneg %p69
        %p687 = pneg %p66
        %s688 = sand.u32 %s36, 1
        %s689 = scalar_lea.sflag [#allocation7], %s688
        %s690 = sand.u32 %s82, 1
        %s691 = smul.addr %s690, 8
        %s692 = scalar_lea.vmem [#allocation6], %s691
        %p693 = pneg %p95
        %p694 = pneg %p92
        %p695 = scmp.lt.s32.totalorder %s41, 1
        %s696 = scalar_select %p695, %s41, 1
        %s697 = smul.addr %s696, 4
        %s698 = smul.addr %s697, 8
        %s699 = scalar_lea.vmem %s2, %s698
        %p700 = pneg %p121
        %p701 = pneg %p118
        %p702 = scmp.lt.s32.totalorder %s41, 1
        %s703 = scalar_select %p702, %s41, 1
        %s704 = scalar_lea.vmem %s3, %s703
        %p705 = pneg %p147
        %p706 = pneg %p144
        %p707 = scmp.lt.s32.totalorder %s41, 1
        %s708 = scalar_select %p707, %s41, 1
        %s709 = smul.addr %s708, 4
        %s710 = smul.addr %s709, 8
        %s711 = scalar_lea.vmem %s4, %s710
        %p712 = pneg %p173
        %p713 = pneg %p170
        %p714 = scmp.lt.s32.totalorder %s41, 1
        %s715 = scalar_select %p714, %s41, 1
        %s716 = scalar_lea.vmem %s5, %s715
        %p717 = pneg %p199
        %p718 = pneg %p196
        %p719 = scmp.lt.s32.totalorder %s41, 1
        %s720 = scalar_select %p719, %s41, 1
        %s721 = smul.addr %s720, 4
        %s722 = smul.addr %s721, 8
        %s723 = scalar_lea.vmem %s6, %s722
        %p724 = pneg %p225
        %p725 = pneg %p222
        %p726 = scmp.lt.s32.totalorder %s41, 1
        %s727 = scalar_select %p726, %s41, 1
        %s728 = scalar_lea.vmem %s7, %s727
        %p729 = pneg %p251
        %p730 = pneg %p248
        %s731 = sand.u32 %s36, 1
        %s732 = scalar_lea.sflag [#allocation7], %s731
        %s733 = sand.u32 %s264, 1
        %s734 = smul.addr %s733, 32
        %s735 = scalar_lea.vmem [#allocation8], %s734
        %p736 = pneg %p277
        %p737 = pneg %p274
        %p738 = scmp.lt.s32.totalorder %s41, 1
        %s739 = scalar_select %p738, %s41, 1
        %s740 = scalar_lea.vmem %s9, %s739
        %p741 = pneg %p303
        %p742 = pneg %p300
        %p743 = scmp.lt.s32.totalorder %s41, 1
        %s744 = scalar_select %p743, %s41, 1
        %s745 = smul.addr %s744, 8
        %s746 = smul.addr %s745, 8
        %s747 = scalar_lea.vmem %s10, %s746
        %p748 = pneg %p329
        %p749 = pneg %p326
        %p750 = scmp.lt.s32.totalorder %s41, 1
        %s751 = scalar_select %p750, %s41, 1
        %s752 = scalar_lea.vmem %s11, %s751
        %p753 = pneg %p355
        %p754 = pneg %p352
        %p755 = scmp.lt.s32.totalorder %s41, 1
        %s756 = scalar_select %p755, %s41, 1
        %s757 = scalar_lea.vmem %s12, %s756
        %p758 = pneg %p381
        %p759 = pneg %p378
        %p760 = scmp.lt.s32.totalorder %s41, 1
        %s761 = scalar_select %p760, %s41, 1
        %s762 = scalar_lea.vmem %s13, %s761
        %p763 = pneg %p407
        %p764 = pneg %p404
        %p765 = scmp.lt.s32.totalorder %s41, 1
        %s766 = scalar_select %p765, %s41, 1
        %s767 = scalar_lea.vmem %s14, %s766
        %p768 = pneg %p433
        %p769 = pneg %p430
        %p770 = scmp.lt.s32.totalorder %s41, 1
        %s771 = scalar_select %p770, %s41, 1
        %s772 = scalar_lea.vmem %s15, %s771
        %p773 = pneg %p459
        %p774 = pneg %p456
        %p775 = pneg %p485
        %p776 = pneg %p482
        %s777 = sand.u32 %s472, 1
        %s778 = scalar_lea.sflag [#allocation5], %s777
        %s779 = sand.u32 %s472, 1
        %s780 = smul.addr %s779, 8
        %s781 = scalar_lea.vmem [#allocation9], %s780
        %p782 = scmp.lt.s32.totalorder %s41, 1
        %s783 = scalar_select %p782, %s41, 1
        %s784 = smul.addr %s783, 4
        %s785 = smul.addr %s784, 8
        %s786 = scalar_lea.vmem %s2, %s785
        %p787 = scmp.lt.s32.totalorder %s41, 1
        %s788 = scalar_select %p787, %s41, 1
        %s789 = scalar_lea.vmem %s3, %s788
        %p790 = scmp.lt.s32.totalorder %s41, 1
        %s791 = scalar_select %p790, %s41, 1
        %s792 = smul.addr %s791, 4
        %s793 = smul.addr %s792, 8
        %s794 = scalar_lea.vmem %s4, %s793
        %p795 = scmp.lt.s32.totalorder %s41, 1
        %s796 = scalar_select %p795, %s41, 1
        %s797 = scalar_lea.vmem %s5, %s796
        %p798 = scmp.lt.s32.totalorder %s41, 1
        %s799 = scalar_select %p798, %s41, 1
        %s800 = smul.addr %s799, 4
        %s801 = smul.addr %s800, 8
        %s802 = scalar_lea.vmem %s6, %s801
        %p803 = scmp.lt.s32.totalorder %s41, 1
        %s804 = scalar_select %p803, %s41, 1
        %s805 = scalar_lea.vmem %s7, %s804
        %p806 = scmp.lt.s32.totalorder %s41, 1
        %s807 = scalar_select %p806, %s41, 1
        %s808 = scalar_lea.vmem %s9, %s807
        %p809 = scmp.lt.s32.totalorder %s41, 1
        %s810 = scalar_select %p809, %s41, 1
        %s811 = smul.addr %s810, 8
        %s812 = smul.addr %s811, 8
        %s813 = scalar_lea.vmem %s10, %s812
        %p814 = scmp.lt.s32.totalorder %s41, 1
        %s815 = scalar_select %p814, %s41, 1
        %s816 = scalar_lea.vmem %s11, %s815
        %p817 = scmp.lt.s32.totalorder %s41, 1
        %s818 = scalar_select %p817, %s41, 1
        %s819 = scalar_lea.vmem %s12, %s818
        %p820 = scmp.lt.s32.totalorder %s41, 1
        %s821 = scalar_select %p820, %s41, 1
        %s822 = scalar_lea.vmem %s13, %s821
        %p823 = scmp.lt.s32.totalorder %s41, 1
        %s824 = scalar_select %p823, %s41, 1
        %s825 = scalar_lea.vmem %s14, %s824
        %p826 = scmp.lt.s32.totalorder %s41, 1
        %s827 = scalar_select %p826, %s41, 1
        %s828 = scalar_lea.vmem %s15, %s827
        %p829 = scmp.eq.s32.totalorder %s41, 0
        // Predicated region
        $region97: #{tpu_custom_call.1} parent=83 // pred_check
          %p830 = pneg %p829
        $region98: #{tpu_custom_call.1} parent=83 // pred_check_branch
          %832 = sbr.rel (%p830) target = $region100
        $region99: #{tpu_custom_call.1} parent=83 // pred_region
          %v833 = vld [vmem:[%s658] sm:$0xff]
          %vm834 = vcmask 261120
          %835 = vst.msk [vmem:[#allocation2] sm:$0xff] %vm834, %v833
        $region100: #{tpu_custom_call.1} parent=83 // pred_fallthru
          _
        %v836 = vld [vmem:[#allocation2] sm:$0xff]
        %v837 = vld [vmem:[%s667] sm:$0xff]
        %v838 = vadd.f32 %v836, %v837
        %v839 = vld [vmem:[%s786] sm:$0xff]
        %v840 = vld [vmem:[%s786 + $0x8] sm:$0xff]
        %v841 = vld [vmem:[%s786 + $0x10] sm:$0xff]
        %v842 = vld [vmem:[%s786 + $0x18] sm:$0xff]
        %v843 = vld [vmem:[%s789] sm:$0x1]
        %v845 = vlaneseq
        %v846 = vshrl.u32 %v845, 7
        %v847 = vsub.s32 0, %v846
        %v848 = vrot.slane %v843, %v847
        %vm850 = vcmask 261120
        %v852 = vsel %vm850, %v838, 0
        %854 = vmatprep.subr.mxu0 0.0
        %855 = vmatpush1.msra.mxu0 %v839
        %856 = vmatprep.subr.mxu0 0.0
        %857 = vmatpush1.msra.mxu0 %v840
        %858 = vmatprep.subr.mxu0 0.0
        %859 = vmatpush1.msra.mxu0 %v841
        %860 = vmatprep.subr.mxu0 0.0
        %861 = vmatpush1.msra.mxu0 %v842
        %862 = vmatprep.subr.mxu0 0.0
        %863 = vmatpush1.msra.mxu0 0.0
        %864 = vmatprep.subr.mxu0 0.0
        %865 = vmatpush1.msra.mxu0 0.0
        %866 = vmatprep.subr.mxu0 0.0
        %867 = vmatpush1.msra.mxu0 0.0
        %868 = vmatprep.subr.mxu0 0.0
        %869 = vmatpush1.msra.mxu0 0.0
        %870 = vmatprep.subr.mxu0 0.0
        %871 = vmatpush1.msra.mxu0 0.0
        %872 = vmatprep.subr.mxu0 0.0
        %873 = vmatpush1.msra.mxu0 0.0
        %874 = vmatprep.subr.mxu0 0.0
        %875 = vmatpush1.msra.mxu0 0.0
        %876 = vmatprep.subr.mxu0 0.0
        %877 = vmatpush1.msra.mxu0 0.0
        %878 = vmatprep.subr.mxu0 0.0
        %879 = vmatpush1.msra.mxu0 0.0
        %880 = vmatprep.subr.mxu0 0.0
        %881 = vmatpush1.msra.mxu0 0.0
        %882 = vmatprep.subr.mxu0 0.0
        %883 = vmatpush1.msra.mxu0 0.0
        %884 = vmatprep.subr.mxu0 0.0
        %885 = vmatpush1.msra.mxu0 0.0
        %886 = vmatprep.subr.mxu0 0.0
        %887 = vmatpush1.msra.mxu0 0.0
        %888 = vmatprep.subr.mxu0 0.0
        %889 = vmatpush1.msra.mxu0 0.0
        %890 = vmatprep.subr.mxu0 0.0
        %891 = vmatpush1.msra.mxu0 0.0
        %892 = vmatprep.subr.mxu0 0.0
        %893 = vmatpush1.msra.mxu0 0.0
        %894 = vmatprep.subr.mxu0 0.0
        %895 = vmatpush1.msra.mxu0 0.0
        %896 = vmatprep.subr.mxu0 0.0
        %897 = vmatpush1.msra.mxu0 0.0
        %898 = vmatprep.subr.mxu0 0.0
        %899 = vmatpush1.msra.mxu0 0.0
        %900 = vmatprep.subr.mxu0 0.0
        %901 = vmatpush1.msra.mxu0 0.0
        %902 = vmatprep.subr.mxu0 0.0
        %903 = vmatpush1.msra.mxu0 0.0
        %904 = vmatprep.subr.mxu0 0.0
        %905 = vmatpush1.msra.mxu0 0.0
        %906 = vmatprep.subr.mxu0 0.0
        %907 = vmatpush1.msra.mxu0 0.0
        %908 = vmatprep.subr.mxu0 0.0
        %909 = vmatpush1.msra.mxu0 0.0
        %910 = vmatprep.subr.mxu0 0.0
        %911 = vmatpush1.msra.mxu0 0.0
        %912 = vmatprep.subr.mxu0 0.0
        %913 = vmatpush1.msra.mxu0 0.0
        %914 = vmatprep.subr.mxu0 0.0
        %915 = vmatpush1.msra.mxu0 0.0
        %916 = vmatprep.subr.mxu0 0.0
        %917 = vmatpush1.msra.mxu0 0.0
        %918 = vmatprep.mubr.f32.mxu0 0.0
        %919 = vmatmul.mubr.f32.gmra.mrb[0].mxu0 %v852
        %v920 = vpop.f32.mrb[0].mxu0
        %v921 = vadd.f32 %v848, %v920
        %v922 = vpop.f32.mrb[0].mxu0
        %923 = vdwg.mxu0
        %v924 = vld [vmem:[%s794] sm:$0xff]
        %v925 = vld [vmem:[%s794 + $0x8] sm:$0xff]
        %v926 = vld [vmem:[%s794 + $0x10] sm:$0xff]
        %v927 = vld [vmem:[%s794 + $0x18] sm:$0xff]
        %v928 = vld [vmem:[%s797] sm:$0x1]
        %v930 = vlaneseq
        %v931 = vshrl.u32 %v930, 7
        %v932 = vsub.s32 0, %v931
        %v933 = vrot.slane %v928, %v932
        %v936 = vsel %vm850, %v836, 0
        %938 = vmatprep.subr.mxu0 0.0
        %939 = vmatpush1.msra.mxu0 %v924
        %940 = vmatprep.subr.mxu0 0.0
        %941 = vmatpush1.msra.mxu0 %v925
        %942 = vmatprep.subr.mxu0 0.0
        %943 = vmatpush1.msra.mxu0 %v926
        %944 = vmatprep.subr.mxu0 0.0
        %945 = vmatpush1.msra.mxu0 %v927
        %946 = vmatprep.subr.mxu0 0.0
        %947 = vmatpush1.msra.mxu0 0.0
        %948 = vmatprep.subr.mxu0 0.0
        %949 = vmatpush1.msra.mxu0 0.0
        %950 = vmatprep.subr.mxu0 0.0
        %951 = vmatpush1.msra.mxu0 0.0
        %952 = vmatprep.subr.mxu0 0.0
        %953 = vmatpush1.msra.mxu0 0.0
        %954 = vmatprep.subr.mxu0 0.0
        %955 = vmatpush1.msra.mxu0 0.0
        %956 = vmatprep.subr.mxu0 0.0
        %957 = vmatpush1.msra.mxu0 0.0
        %958 = vmatprep.subr.mxu0 0.0
        %959 = vmatpush1.msra.mxu0 0.0
        %960 = vmatprep.subr.mxu0 0.0
        %961 = vmatpush1.msra.mxu0 0.0
        %962 = vmatprep.subr.mxu0 0.0
        %963 = vmatpush1.msra.mxu0 0.0
        %964 = vmatprep.subr.mxu0 0.0
        %965 = vmatpush1.msra.mxu0 0.0
        %966 = vmatprep.subr.mxu0 0.0
        %967 = vmatpush1.msra.mxu0 0.0
        %968 = vmatprep.subr.mxu0 0.0
        %969 = vmatpush1.msra.mxu0 0.0
        %970 = vmatprep.subr.mxu0 0.0
        %971 = vmatpush1.msra.mxu0 0.0
        %972 = vmatprep.subr.mxu0 0.0
        %973 = vmatpush1.msra.mxu0 0.0
        %974 = vmatprep.subr.mxu0 0.0
        %975 = vmatpush1.msra.mxu0 0.0
        %976 = vmatprep.subr.mxu0 0.0
        %977 = vmatpush1.msra.mxu0 0.0
        %978 = vmatprep.subr.mxu0 0.0
        %979 = vmatpush1.msra.mxu0 0.0
        %980 = vmatprep.subr.mxu0 0.0
        %981 = vmatpush1.msra.mxu0 0.0
        %982 = vmatprep.subr.mxu0 0.0
        %983 = vmatpush1.msra.mxu0 0.0
        %984 = vmatprep.subr.mxu0 0.0
        %985 = vmatpush1.msra.mxu0 0.0
        %986 = vmatprep.subr.mxu0 0.0
        %987 = vmatpush1.msra.mxu0 0.0
        %988 = vmatprep.subr.mxu0 0.0
        %989 = vmatpush1.msra.mxu0 0.0
        %990 = vmatprep.subr.mxu0 0.0
        %991 = vmatpush1.msra.mxu0 0.0
        %992 = vmatprep.subr.mxu0 0.0
        %993 = vmatpush1.msra.mxu0 0.0
        %994 = vmatprep.subr.mxu0 0.0
        %995 = vmatpush1.msra.mxu0 0.0
        %996 = vmatprep.subr.mxu0 0.0
        %997 = vmatpush1.msra.mxu0 0.0
        %998 = vmatprep.subr.mxu0 0.0
        %999 = vmatpush1.msra.mxu0 0.0
        %1000 = vmatprep.subr.mxu0 0.0
        %1001 = vmatpush1.msra.mxu0 0.0
        %1002 = vmatprep.mubr.f32.mxu0 0.0
        %1003 = vmatmul.mubr.f32.gmra.mrb[0].mxu0 %v936
        %v1004 = vpop.f32.mrb[0].mxu0
        %v1005 = vadd.f32 %v933, %v1004
        %v1006 = vpop.f32.mrb[0].mxu0
        %1007 = vdwg.mxu0
        %1009 = vrot.lane.b32.xlu0 %v921, 120
        %v1010 = vpop.permute.xlu0 %1009
        %1011 = vrot.lane.b32.xlu0 %v921, 112
        %v1012 = vpop.permute.xlu0 %1011
        %1013 = vrot.lane.b32.xlu0 %v921, 104
        %v1014 = vpop.permute.xlu0 %1013
        %1016 = vrot.lane.b32.xlu0 %v1005, 120
        %v1017 = vpop.permute.xlu0 %1016
        %1019 = vrot.lane.b32.xlu0 %v1005, 112
        %v1020 = vpop.permute.xlu0 %1019
        %1022 = vrot.lane.b32.xlu0 %v1005, 104
        %v1023 = vpop.permute.xlu0 %1022
        %1025 = vrot.lane.b32.xlu0 %v921, 96
        %v1026 = vpop.permute.xlu0 %1025
        %vm1027 = vcmask 64512
        %v1028 = vsel %vm1027, %v921, 0
        %v1030 = vsel %vm1027, %v1026, 0
        %1032 = vmatprep.subr.mxu0 0.0
        %1033 = vmatpush1.xpose.msra.mxu0 %v1030
        %1034 = vmatprep.subr.mxu0 0.0
        %1035 = vmatpush1.xpose.msra.mxu0 0.0
        %1036 = vmatprep.subr.mxu0 0.0
        %1037 = vmatpush1.xpose.msra.mxu0 0.0
        %1038 = vmatprep.subr.mxu0 0.0
        %1039 = vmatpush1.xpose.msra.mxu0 0.0
        %1040 = vmatprep.subr.mxu0 0.0
        %1041 = vmatpush1.xpose.msra.mxu0 0.0
        %1042 = vmatprep.subr.mxu0 0.0
        %1043 = vmatpush1.xpose.msra.mxu0 0.0
        %1044 = vmatprep.subr.mxu0 0.0
        %1045 = vmatpush1.xpose.msra.mxu0 0.0
        %1046 = vmatprep.subr.mxu0 0.0
        %1047 = vmatpush1.xpose.msra.mxu0 0.0
        %1048 = vmatprep.subr.mxu0 0.0
        %1049 = vmatpush1.xpose.msra.mxu0 0.0
        %1050 = vmatprep.subr.mxu0 0.0
        %1051 = vmatpush1.xpose.msra.mxu0 0.0
        %1052 = vmatprep.subr.mxu0 0.0
        %1053 = vmatpush1.xpose.msra.mxu0 0.0
        %1054 = vmatprep.subr.mxu0 0.0
        %1055 = vmatpush1.xpose.msra.mxu0 0.0
        %1056 = vmatprep.subr.mxu0 0.0
        %1057 = vmatpush1.xpose.msra.mxu0 0.0
        %1058 = vmatprep.subr.mxu0 0.0
        %1059 = vmatpush1.xpose.msra.mxu0 0.0
        %1060 = vmatprep.subr.mxu0 0.0
        %1061 = vmatpush1.xpose.msra.mxu0 0.0
        %1062 = vmatprep.subr.mxu0 0.0
        %1063 = vmatpush1.xpose.msra.mxu0 0.0
        %1064 = vmatprep.subr.mxu0 0.0
        %1065 = vmatpush1.xpose.msra.mxu0 0.0
        %1066 = vmatprep.subr.mxu0 0.0
        %1067 = vmatpush1.xpose.msra.mxu0 0.0
        %1068 = vmatprep.subr.mxu0 0.0
        %1069 = vmatpush1.xpose.msra.mxu0 0.0
        %1070 = vmatprep.subr.mxu0 0.0
        %1071 = vmatpush1.xpose.msra.mxu0 0.0
        %1072 = vmatprep.subr.mxu0 0.0
        %1073 = vmatpush1.xpose.msra.mxu0 0.0
        %1074 = vmatprep.subr.mxu0 0.0
        %1075 = vmatpush1.xpose.msra.mxu0 0.0
        %1076 = vmatprep.subr.mxu0 0.0
        %1077 = vmatpush1.xpose.msra.mxu0 0.0
        %1078 = vmatprep.subr.mxu0 0.0
        %1079 = vmatpush1.xpose.msra.mxu0 0.0
        %1080 = vmatprep.subr.mxu0 0.0
        %1081 = vmatpush1.xpose.msra.mxu0 0.0
        %1082 = vmatprep.subr.mxu0 0.0
        %1083 = vmatpush1.xpose.msra.mxu0 0.0
        %1084 = vmatprep.subr.mxu0 0.0
        %1085 = vmatpush1.xpose.msra.mxu0 0.0
        %1086 = vmatprep.subr.mxu0 0.0
        %1087 = vmatpush1.xpose.msra.mxu0 0.0
        %1088 = vmatprep.subr.mxu0 0.0
        %1089 = vmatpush1.xpose.msra.mxu0 0.0
        %1090 = vmatprep.subr.mxu0 0.0
        %1091 = vmatpush1.xpose.msra.mxu0 0.0
        %1092 = vmatprep.subr.mxu0 0.0
        %1093 = vmatpush1.xpose.msra.mxu0 0.0
        %1094 = vmatprep.subr.mxu0 0.0
        %1095 = vmatpush1.xpose.msra.mxu0 0.0
        %1096 = vmatprep.mubr.f32.mxu0 0.0
        %1097 = vmatmul.mubr.f32.gmra.mrb[0].mxu0 %v1028
        %v1098 = vpop.f32.mrb[0].mxu0
        %v1099 = vadd.f32 0.0, %v1098
        %v1100 = vpop.f32.mrb[0].mxu0
        %1101 = vdwg.mxu0
        %1102 = vrot.lane.b32.xlu0 %v1010, 96
        %v1103 = vpop.permute.xlu0 %1102
        %v1104 = vsel %vm1027, %v1010, 0
        %v1106 = vsel %vm1027, %v1103, 0
        %1108 = vmatprep.subr.mxu0 0.0
        %1109 = vmatpush1.xpose.msra.mxu0 %v1106
        %1110 = vmatprep.subr.mxu0 0.0
        %1111 = vmatpush1.xpose.msra.mxu0 0.0
        %1112 = vmatprep.subr.mxu0 0.0
        %1113 = vmatpush1.xpose.msra.mxu0 0.0
        %1114 = vmatprep.subr.mxu0 0.0
        %1115 = vmatpush1.xpose.msra.mxu0 0.0
        %1116 = vmatprep.subr.mxu0 0.0
        %1117 = vmatpush1.xpose.msra.mxu0 0.0
        %1118 = vmatprep.subr.mxu0 0.0
        %1119 = vmatpush1.xpose.msra.mxu0 0.0
        %1120 = vmatprep.subr.mxu0 0.0
        %1121 = vmatpush1.xpose.msra.mxu0 0.0
        %1122 = vmatprep.subr.mxu0 0.0
        %1123 = vmatpush1.xpose.msra.mxu0 0.0
        %1124 = vmatprep.subr.mxu0 0.0
        %1125 = vmatpush1.xpose.msra.mxu0 0.0
        %1126 = vmatprep.subr.mxu0 0.0
        %1127 = vmatpush1.xpose.msra.mxu0 0.0
        %1128 = vmatprep.subr.mxu0 0.0
        %1129 = vmatpush1.xpose.msra.mxu0 0.0
        %1130 = vmatprep.subr.mxu0 0.0
        %1131 = vmatpush1.xpose.msra.mxu0 0.0
        %1132 = vmatprep.subr.mxu0 0.0
        %1133 = vmatpush1.xpose.msra.mxu0 0.0
        %1134 = vmatprep.subr.mxu0 0.0
        %1135 = vmatpush1.xpose.msra.mxu0 0.0
        %1136 = vmatprep.subr.mxu0 0.0
        %1137 = vmatpush1.xpose.msra.mxu0 0.0
        %1138 = vmatprep.subr.mxu0 0.0
        %1139 = vmatpush1.xpose.msra.mxu0 0.0
        %1140 = vmatprep.subr.mxu0 0.0
        %1141 = vmatpush1.xpose.msra.mxu0 0.0
        %1142 = vmatprep.subr.mxu0 0.0
        %1143 = vmatpush1.xpose.msra.mxu0 0.0
        %1144 = vmatprep.subr.mxu0 0.0
        %1145 = vmatpush1.xpose.msra.mxu0 0.0
        %1146 = vmatprep.subr.mxu0 0.0
        %1147 = vmatpush1.xpose.msra.mxu0 0.0
        %1148 = vmatprep.subr.mxu0 0.0
        %1149 = vmatpush1.xpose.msra.mxu0 0.0
        %1150 = vmatprep.subr.mxu0 0.0
        %1151 = vmatpush1.xpose.msra.mxu0 0.0
        %1152 = vmatprep.subr.mxu0 0.0
        %1153 = vmatpush1.xpose.msra.mxu0 0.0
        %1154 = vmatprep.subr.mxu0 0.0
        %1155 = vmatpush1.xpose.msra.mxu0 0.0
        %1156 = vmatprep.subr.mxu0 0.0
        %1157 = vmatpush1.xpose.msra.mxu0 0.0
        %1158 = vmatprep.subr.mxu0 0.0
        %1159 = vmatpush1.xpose.msra.mxu0 0.0
        %1160 = vmatprep.subr.mxu0 0.0
        %1161 = vmatpush1.xpose.msra.mxu0 0.0
        %1162 = vmatprep.subr.mxu0 0.0
        %1163 = vmatpush1.xpose.msra.mxu0 0.0
        %1164 = vmatprep.subr.mxu0 0.0
        %1165 = vmatpush1.xpose.msra.mxu0 0.0
        %1166 = vmatprep.subr.mxu0 0.0
        %1167 = vmatpush1.xpose.msra.mxu0 0.0
        %1168 = vmatprep.subr.mxu0 0.0
        %1169 = vmatpush1.xpose.msra.mxu0 0.0
        %1170 = vmatprep.subr.mxu0 0.0
        %1171 = vmatpush1.xpose.msra.mxu0 0.0
        %1172 = vmatprep.mubr.f32.mxu0 0.0
        %1173 = vmatmul.mubr.f32.gmra.mrb[0].mxu0 %v1104
        %v1174 = vpop.f32.mrb[0].mxu0
        %v1175 = vadd.f32 0.0, %v1174
        %v1176 = vpop.f32.mrb[0].mxu0
        %1177 = vdwg.mxu0
        %1178 = vrot.lane.b32.xlu0 %v1012, 96
        %v1179 = vpop.permute.xlu0 %1178
        %v1180 = vsel %vm1027, %v1012, 0
        %v1182 = vsel %vm1027, %v1179, 0
        %1184 = vmatprep.subr.mxu0 0.0
        %1185 = vmatpush1.xpose.msra.mxu0 %v1182
        %1186 = vmatprep.subr.mxu0 0.0
        %1187 = vmatpush1.xpose.msra.mxu0 0.0
        %1188 = vmatprep.subr.mxu0 0.0
        %1189 = vmatpush1.xpose.msra.mxu0 0.0
        %1190 = vmatprep.subr.mxu0 0.0
        %1191 = vmatpush1.xpose.msra.mxu0 0.0
        %1192 = vmatprep.subr.mxu0 0.0
        %1193 = vmatpush1.xpose.msra.mxu0 0.0
        %1194 = vmatprep.subr.mxu0 0.0
        %1195 = vmatpush1.xpose.msra.mxu0 0.0
        %1196 = vmatprep.subr.mxu0 0.0
        %1197 = vmatpush1.xpose.msra.mxu0 0.0
        %1198 = vmatprep.subr.mxu0 0.0
        %1199 = vmatpush1.xpose.msra.mxu0 0.0
        %1200 = vmatprep.subr.mxu0 0.0
        %1201 = vmatpush1.xpose.msra.mxu0 0.0
        %1202 = vmatprep.subr.mxu0 0.0
        %1203 = vmatpush1.xpose.msra.mxu0 0.0
        %1204 = vmatprep.subr.mxu0 0.0
        %1205 = vmatpush1.xpose.msra.mxu0 0.0
        %1206 = vmatprep.subr.mxu0 0.0
        %1207 = vmatpush1.xpose.msra.mxu0 0.0
        %1208 = vmatprep.subr.mxu0 0.0
        %1209 = vmatpush1.xpose.msra.mxu0 0.0
        %1210 = vmatprep.subr.mxu0 0.0
        %1211 = vmatpush1.xpose.msra.mxu0 0.0
        %1212 = vmatprep.subr.mxu0 0.0
        %1213 = vmatpush1.xpose.msra.mxu0 0.0
        %1214 = vmatprep.subr.mxu0 0.0
        %1215 = vmatpush1.xpose.msra.mxu0 0.0
        %1216 = vmatprep.subr.mxu0 0.0
        %1217 = vmatpush1.xpose.msra.mxu0 0.0
        %1218 = vmatprep.subr.mxu0 0.0
        %1219 = vmatpush1.xpose.msra.mxu0 0.0
        %1220 = vmatprep.subr.mxu0 0.0
        %1221 = vmatpush1.xpose.msra.mxu0 0.0
        %1222 = vmatprep.subr.mxu0 0.0
        %1223 = vmatpush1.xpose.msra.mxu0 0.0
        %1224 = vmatprep.subr.mxu0 0.0
        %1225 = vmatpush1.xpose.msra.mxu0 0.0
        %1226 = vmatprep.subr.mxu0 0.0
        %1227 = vmatpush1.xpose.msra.mxu0 0.0
        %1228 = vmatprep.subr.mxu0 0.0
        %1229 = vmatpush1.xpose.msra.mxu0 0.0
        %1230 = vmatprep.subr.mxu0 0.0
        %1231 = vmatpush1.xpose.msra.mxu0 0.0
        %1232 = vmatprep.subr.mxu0 0.0
        %1233 = vmatpush1.xpose.msra.mxu0 0.0
        %1234 = vmatprep.subr.mxu0 0.0
        %1235 = vmatpush1.xpose.msra.mxu0 0.0
        %1236 = vmatprep.subr.mxu0 0.0
        %1237 = vmatpush1.xpose.msra.mxu0 0.0
        %1238 = vmatprep.subr.mxu0 0.0
        %1239 = vmatpush1.xpose.msra.mxu0 0.0
        %1240 = vmatprep.subr.mxu0 0.0
        %1241 = vmatpush1.xpose.msra.mxu0 0.0
        %1242 = vmatprep.subr.mxu0 0.0
        %1243 = vmatpush1.xpose.msra.mxu0 0.0
        %1244 = vmatprep.subr.mxu0 0.0
        %1245 = vmatpush1.xpose.msra.mxu0 0.0
        %1246 = vmatprep.subr.mxu0 0.0
        %1247 = vmatpush1.xpose.msra.mxu0 0.0
        %1248 = vmatprep.mubr.f32.mxu0 0.0
        %1249 = vmatmul.mubr.f32.gmra.mrb[0].mxu0 %v1180
        %v1250 = vpop.f32.mrb[0].mxu0
        %v1251 = vadd.f32 0.0, %v1250
        %v1252 = vpop.f32.mrb[0].mxu0
        %1253 = vdwg.mxu0
        %1254 = vrot.lane.b32.xlu0 %v1014, 96
        %v1255 = vpop.permute.xlu0 %1254
        %v1256 = vsel %vm1027, %v1014, 0
        %v1258 = vsel %vm1027, %v1255, 0
        %1260 = vmatprep.subr.mxu0 0.0
        %1261 = vmatpush1.xpose.msra.mxu0 %v1258
        %1262 = vmatprep.subr.mxu0 0.0
        %1263 = vmatpush1.xpose.msra.mxu0 0.0
        %1264 = vmatprep.subr.mxu0 0.0
        %1265 = vmatpush1.xpose.msra.mxu0 0.0
        %1266 = vmatprep.subr.mxu0 0.0
        %1267 = vmatpush1.xpose.msra.mxu0 0.0
        %1268 = vmatprep.subr.mxu0 0.0
        %1269 = vmatpush1.xpose.msra.mxu0 0.0
        %1270 = vmatprep.subr.mxu0 0.0
        %1271 = vmatpush1.xpose.msra.mxu0 0.0
        %1272 = vmatprep.subr.mxu0 0.0
        %1273 = vmatpush1.xpose.msra.mxu0 0.0
        %1274 = vmatprep.subr.mxu0 0.0
        %1275 = vmatpush1.xpose.msra.mxu0 0.0
        %1276 = vmatprep.subr.mxu0 0.0
        %1277 = vmatpush1.xpose.msra.mxu0 0.0
        %1278 = vmatprep.subr.mxu0 0.0
        %1279 = vmatpush1.xpose.msra.mxu0 0.0
        %1280 = vmatprep.subr.mxu0 0.0
        %1281 = vmatpush1.xpose.msra.mxu0 0.0
        %1282 = vmatprep.subr.mxu0 0.0
        %1283 = vmatpush1.xpose.msra.mxu0 0.0
        %1284 = vmatprep.subr.mxu0 0.0
        %1285 = vmatpush1.xpose.msra.mxu0 0.0
        %1286 = vmatprep.subr.mxu0 0.0
        %1287 = vmatpush1.xpose.msra.mxu0 0.0
        %1288 = vmatprep.subr.mxu0 0.0
        %1289 = vmatpush1.xpose.msra.mxu0 0.0
        %1290 = vmatprep.subr.mxu0 0.0
        %1291 = vmatpush1.xpose.msra.mxu0 0.0
        %1292 = vmatprep.subr.mxu0 0.0
        %1293 = vmatpush1.xpose.msra.mxu0 0.0
        %1294 = vmatprep.subr.mxu0 0.0
        %1295 = vmatpush1.xpose.msra.mxu0 0.0
        %1296 = vmatprep.subr.mxu0 0.0
        %1297 = vmatpush1.xpose.msra.mxu0 0.0
        %1298 = vmatprep.subr.mxu0 0.0
        %1299 = vmatpush1.xpose.msra.mxu0 0.0
        %1300 = vmatprep.subr.mxu0 0.0
        %1301 = vmatpush1.xpose.msra.mxu0 0.0
        %1302 = vmatprep.subr.mxu0 0.0
        %1303 = vmatpush1.xpose.msra.mxu0 0.0
        %1304 = vmatprep.subr.mxu0 0.0
        %1305 = vmatpush1.xpose.msra.mxu0 0.0
        %1306 = vmatprep.subr.mxu0 0.0
        %1307 = vmatpush1.xpose.msra.mxu0 0.0
        %1308 = vmatprep.subr.mxu0 0.0
        %1309 = vmatpush1.xpose.msra.mxu0 0.0
        %1310 = vmatprep.subr.mxu0 0.0
        %1311 = vmatpush1.xpose.msra.mxu0 0.0
        %1312 = vmatprep.subr.mxu0 0.0
        %1313 = vmatpush1.xpose.msra.mxu0 0.0
        %1314 = vmatprep.subr.mxu0 0.0
        %1315 = vmatpush1.xpose.msra.mxu0 0.0
        %1316 = vmatprep.subr.mxu0 0.0
        %1317 = vmatpush1.xpose.msra.mxu0 0.0
        %1318 = vmatprep.subr.mxu0 0.0
        %1319 = vmatpush1.xpose.msra.mxu0 0.0
        %1320 = vmatprep.subr.mxu0 0.0
        %1321 = vmatpush1.xpose.msra.mxu0 0.0
        %1322 = vmatprep.subr.mxu0 0.0
        %1323 = vmatpush1.xpose.msra.mxu0 0.0
        %1324 = vmatprep.mubr.f32.mxu0 0.0
        %1325 = vmatmul.mubr.f32.gmra.mrb[0].mxu0 %v1256
        %v1326 = vpop.f32.mrb[0].mxu0
        %v1327 = vadd.f32 0.0, %v1326
        %v1328 = vpop.f32.mrb[0].mxu0
        %1329 = vdwg.mxu0
        %v1330 = vsel %vm1027, %v1099, -inf
        %1331 = vmax.xlane.f32.xlu0 %v1330
        %v1332 = vpop.xlane.xlu0 %1331
        %v1333 = vsel %vm1027, %v1175, -inf
        %1334 = vmax.xlane.f32.xlu0 %v1333
        %v1335 = vpop.xlane.xlu0 %1334
        %v1336 = vsel %vm1027, %v1251, -inf
        %1337 = vmax.xlane.f32.xlu0 %v1336
        %v1338 = vpop.xlane.xlu0 %1337
        %v1339 = vsel %vm1027, %v1327, -inf
        %1340 = vmax.xlane.f32.xlu0 %v1339
        %v1341 = vpop.xlane.xlu0 %1340
        %v1342 = vsub.f32 %v1099, %v1332
        %v1343 = vsub.f32 %v1175, %v1335
        %v1344 = vsub.f32 %v1251, %v1338
        %v1345 = vsub.f32 %v1327, %v1341
        %v1346 = vmul.f32 %v1342, 1.442695
        %v1347 = vpow.pop %v1346
        %v1348 = vmul.f32 %v1343, 1.442695
        %v1349 = vpow.pop %v1348
        %v1350 = vmul.f32 %v1344, 1.442695
        %v1351 = vpow.pop %v1350
        %v1352 = vmul.f32 %v1345, 1.442695
        %v1353 = vpow.pop %v1352
        %v1354 = vsel %vm1027, %v1347, 0.0
        %1355 = vadd.xlane.f32.xlu0 %v1354
        %v1356 = vpop.xlane.xlu0 %1355
        %v1357 = vsel %vm1027, %v1349, 0.0
        %1358 = vadd.xlane.f32.xlu0 %v1357
        %v1359 = vpop.xlane.xlu0 %1358
        %v1360 = vsel %vm1027, %v1351, 0.0
        %1361 = vadd.xlane.f32.xlu0 %v1360
        %v1362 = vpop.xlane.xlu0 %1361
        %v1363 = vsel %vm1027, %v1353, 0.0
        %1364 = vadd.xlane.f32.xlu0 %v1363
        %v1365 = vpop.xlane.xlu0 %1364
        %v1366 = vrcp.pop %v1356
        %v1367 = vrcp.pop %v1359
        %v1368 = vrcp.pop %v1362
        %v1369 = vrcp.pop %v1365
        %v1370 = vmul.f32 %v1347, %v1366
        %v1371 = vmul.f32 %v1349, %v1367
        %v1372 = vmul.f32 %v1351, %v1368
        %v1373 = vmul.f32 %v1353, %v1369
        %v1375 = vsel %vm1027, %v1370, 0
        %1377 = vmatprep.subr.mxu0 0.0
        %1378 = vmatpush1.msra.mxu0 %v1005
        %1379 = vmatprep.subr.mxu0 0.0
        %1380 = vmatpush1.msra.mxu0 0.0
        %1381 = vmatprep.subr.mxu0 0.0
        %1382 = vmatpush1.msra.mxu0 0.0
        %1383 = vmatprep.subr.mxu0 0.0
        %1384 = vmatpush1.msra.mxu0 0.0
        %1385 = vmatprep.subr.mxu0 0.0
        %1386 = vmatpush1.msra.mxu0 0.0
        %1387 = vmatprep.subr.mxu0 0.0
        %1388 = vmatpush1.msra.mxu0 0.0
        %1389 = vmatprep.subr.mxu0 0.0
        %1390 = vmatpush1.msra.mxu0 0.0
        %1391 = vmatprep.subr.mxu0 0.0
        %1392 = vmatpush1.msra.mxu0 0.0
        %1393 = vmatprep.subr.mxu0 0.0
        %1394 = vmatpush1.msra.mxu0 0.0
        %1395 = vmatprep.subr.mxu0 0.0
        %1396 = vmatpush1.msra.mxu0 0.0
        %1397 = vmatprep.subr.mxu0 0.0
        %1398 = vmatpush1.msra.mxu0 0.0
        %1399 = vmatprep.subr.mxu0 0.0
        %1400 = vmatpush1.msra.mxu0 0.0
        %1401 = vmatprep.subr.mxu0 0.0
        %1402 = vmatpush1.msra.mxu0 0.0
        %1403 = vmatprep.subr.mxu0 0.0
        %1404 = vmatpush1.msra.mxu0 0.0
        %1405 = vmatprep.subr.mxu0 0.0
        %1406 = vmatpush1.msra.mxu0 0.0
        %1407 = vmatprep.subr.mxu0 0.0
        %1408 = vmatpush1.msra.mxu0 0.0
        %1409 = vmatprep.subr.mxu0 0.0
        %1410 = vmatpush1.msra.mxu0 0.0
        %1411 = vmatprep.subr.mxu0 0.0
        %1412 = vmatpush1.msra.mxu0 0.0
        %1413 = vmatprep.subr.mxu0 0.0
        %1414 = vmatpush1.msra.mxu0 0.0
        %1415 = vmatprep.subr.mxu0 0.0
        %1416 = vmatpush1.msra.mxu0 0.0
        %1417 = vmatprep.subr.mxu0 0.0
        %1418 = vmatpush1.msra.mxu0 0.0
        %1419 = vmatprep.subr.mxu0 0.0
        %1420 = vmatpush1.msra.mxu0 0.0
        %1421 = vmatprep.subr.mxu0 0.0
        %1422 = vmatpush1.msra.mxu0 0.0
        %1423 = vmatprep.subr.mxu0 0.0
        %1424 = vmatpush1.msra.mxu0 0.0
        %1425 = vmatprep.subr.mxu0 0.0
        %1426 = vmatpush1.msra.mxu0 0.0
        %1427 = vmatprep.subr.mxu0 0.0
        %1428 = vmatpush1.msra.mxu0 0.0
        %1429 = vmatprep.subr.mxu0 0.0
        %1430 = vmatpush1.msra.mxu0 0.0
        %1431 = vmatprep.subr.mxu0 0.0
        %1432 = vmatpush1.msra.mxu0 0.0
        %1433 = vmatprep.subr.mxu0 0.0
        %1434 = vmatpush1.msra.mxu0 0.0
        %1435 = vmatprep.subr.mxu0 0.0
        %1436 = vmatpush1.msra.mxu0 0.0
        %1437 = vmatprep.subr.mxu0 0.0
        %1438 = vmatpush1.msra.mxu0 0.0
        %1439 = vmatprep.subr.mxu0 0.0
        %1440 = vmatpush1.msra.mxu0 0.0
        %1441 = vmatprep.mubr.f32.mxu0 0.0
        %1442 = vmatmul.mubr.f32.gmra.mrb[0].mxu0 %v1375
        %v1443 = vpop.f32.mrb[0].mxu0
        %v1444 = vadd.f32 0.0, %v1443
        %v1445 = vpop.f32.mrb[0].mxu0
        %1446 = vdwg.mxu0
        %v1448 = vsel %vm1027, %v1371, 0
        %1450 = vmatprep.subr.mxu0 0.0
        %1451 = vmatpush1.msra.mxu0 %v1017
        %1452 = vmatprep.subr.mxu0 0.0
        %1453 = vmatpush1.msra.mxu0 0.0
        %1454 = vmatprep.subr.mxu0 0.0
        %1455 = vmatpush1.msra.mxu0 0.0
        %1456 = vmatprep.subr.mxu0 0.0
        %1457 = vmatpush1.msra.mxu0 0.0
        %1458 = vmatprep.subr.mxu0 0.0
        %1459 = vmatpush1.msra.mxu0 0.0
        %1460 = vmatprep.subr.mxu0 0.0
        %1461 = vmatpush1.msra.mxu0 0.0
        %1462 = vmatprep.subr.mxu0 0.0
        %1463 = vmatpush1.msra.mxu0 0.0
        %1464 = vmatprep.subr.mxu0 0.0
        %1465 = vmatpush1.msra.mxu0 0.0
        %1466 = vmatprep.subr.mxu0 0.0
        %1467 = vmatpush1.msra.mxu0 0.0
        %1468 = vmatprep.subr.mxu0 0.0
        %1469 = vmatpush1.msra.mxu0 0.0
        %1470 = vmatprep.subr.mxu0 0.0
        %1471 = vmatpush1.msra.mxu0 0.0
        %1472 = vmatprep.subr.mxu0 0.0
        %1473 = vmatpush1.msra.mxu0 0.0
        %1474 = vmatprep.subr.mxu0 0.0
        %1475 = vmatpush1.msra.mxu0 0.0
        %1476 = vmatprep.subr.mxu0 0.0
        %1477 = vmatpush1.msra.mxu0 0.0
        %1478 = vmatprep.subr.mxu0 0.0
        %1479 = vmatpush1.msra.mxu0 0.0
        %1480 = vmatprep.subr.mxu0 0.0
        %1481 = vmatpush1.msra.mxu0 0.0
        %1482 = vmatprep.subr.mxu0 0.0
        %1483 = vmatpush1.msra.mxu0 0.0
        %1484 = vmatprep.subr.mxu0 0.0
        %1485 = vmatpush1.msra.mxu0 0.0
        %1486 = vmatprep.subr.mxu0 0.0
        %1487 = vmatpush1.msra.mxu0 0.0
        %1488 = vmatprep.subr.mxu0 0.0
        %1489 = vmatpush1.msra.mxu0 0.0
        %1490 = vmatprep.subr.mxu0 0.0
        %1491 = vmatpush1.msra.mxu0 0.0
        %1492 = vmatprep.subr.mxu0 0.0
        %1493 = vmatpush1.msra.mxu0 0.0
        %1494 = vmatprep.subr.mxu0 0.0
        %1495 = vmatpush1.msra.mxu0 0.0
        %1496 = vmatprep.subr.mxu0 0.0
        %1497 = vmatpush1.msra.mxu0 0.0
        %1498 = vmatprep.subr.mxu0 0.0
        %1499 = vmatpush1.msra.mxu0 0.0
        %1500 = vmatprep.subr.mxu0 0.0
        %1501 = vmatpush1.msra.mxu0 0.0
        %1502 = vmatprep.subr.mxu0 0.0
        %1503 = vmatpush1.msra.mxu0 0.0
        %1504 = vmatprep.subr.mxu0 0.0
        %1505 = vmatpush1.msra.mxu0 0.0
        %1506 = vmatprep.subr.mxu0 0.0
        %1507 = vmatpush1.msra.mxu0 0.0
        %1508 = vmatprep.subr.mxu0 0.0
        %1509 = vmatpush1.msra.mxu0 0.0
        %1510 = vmatprep.subr.mxu0 0.0
        %1511 = vmatpush1.msra.mxu0 0.0
        %1512 = vmatprep.subr.mxu0 0.0
        %1513 = vmatpush1.msra.mxu0 0.0
        %1514 = vmatprep.mubr.f32.mxu0 0.0
        %1515 = vmatmul.mubr.f32.gmra.mrb[0].mxu0 %v1448
        %v1516 = vpop.f32.mrb[0].mxu0
        %v1517 = vadd.f32 0.0, %v1516
        %v1518 = vpop.f32.mrb[0].mxu0
        %1519 = vdwg.mxu0
        %v1521 = vsel %vm1027, %v1372, 0
        %1523 = vmatprep.subr.mxu0 0.0
        %1524 = vmatpush1.msra.mxu0 %v1020
        %1525 = vmatprep.subr.mxu0 0.0
        %1526 = vmatpush1.msra.mxu0 0.0
        %1527 = vmatprep.subr.mxu0 0.0
        %1528 = vmatpush1.msra.mxu0 0.0
        %1529 = vmatprep.subr.mxu0 0.0
        %1530 = vmatpush1.msra.mxu0 0.0
        %1531 = vmatprep.subr.mxu0 0.0
        %1532 = vmatpush1.msra.mxu0 0.0
        %1533 = vmatprep.subr.mxu0 0.0
        %1534 = vmatpush1.msra.mxu0 0.0
        %1535 = vmatprep.subr.mxu0 0.0
        %1536 = vmatpush1.msra.mxu0 0.0
        %1537 = vmatprep.subr.mxu0 0.0
        %1538 = vmatpush1.msra.mxu0 0.0
        %1539 = vmatprep.subr.mxu0 0.0
        %1540 = vmatpush1.msra.mxu0 0.0
        %1541 = vmatprep.subr.mxu0 0.0
        %1542 = vmatpush1.msra.mxu0 0.0
        %1543 = vmatprep.subr.mxu0 0.0
        %1544 = vmatpush1.msra.mxu0 0.0
        %1545 = vmatprep.subr.mxu0 0.0
        %1546 = vmatpush1.msra.mxu0 0.0
        %1547 = vmatprep.subr.mxu0 0.0
        %1548 = vmatpush1.msra.mxu0 0.0
        %1549 = vmatprep.subr.mxu0 0.0
        %1550 = vmatpush1.msra.mxu0 0.0
        %1551 = vmatprep.subr.mxu0 0.0
        %1552 = vmatpush1.msra.mxu0 0.0
        %1553 = vmatprep.subr.mxu0 0.0
        %1554 = vmatpush1.msra.mxu0 0.0
        %1555 = vmatprep.subr.mxu0 0.0
        %1556 = vmatpush1.msra.mxu0 0.0
        %1557 = vmatprep.subr.mxu0 0.0
        %1558 = vmatpush1.msra.mxu0 0.0
        %1559 = vmatprep.subr.mxu0 0.0
        %1560 = vmatpush1.msra.mxu0 0.0
        %1561 = vmatprep.subr.mxu0 0.0
        %1562 = vmatpush1.msra.mxu0 0.0
        %1563 = vmatprep.subr.mxu0 0.0
        %1564 = vmatpush1.msra.mxu0 0.0
        %1565 = vmatprep.subr.mxu0 0.0
        %1566 = vmatpush1.msra.mxu0 0.0
        %1567 = vmatprep.subr.mxu0 0.0
        %1568 = vmatpush1.msra.mxu0 0.0
        %1569 = vmatprep.subr.mxu0 0.0
        %1570 = vmatpush1.msra.mxu0 0.0
        %1571 = vmatprep.subr.mxu0 0.0
        %1572 = vmatpush1.msra.mxu0 0.0
        %1573 = vmatprep.subr.mxu0 0.0
        %1574 = vmatpush1.msra.mxu0 0.0
        %1575 = vmatprep.subr.mxu0 0.0
        %1576 = vmatpush1.msra.mxu0 0.0
        %1577 = vmatprep.subr.mxu0 0.0
        %1578 = vmatpush1.msra.mxu0 0.0
        %1579 = vmatprep.subr.mxu0 0.0
        %1580 = vmatpush1.msra.mxu0 0.0
        %1581 = vmatprep.subr.mxu0 0.0
        %1582 = vmatpush1.msra.mxu0 0.0
        %1583 = vmatprep.subr.mxu0 0.0
        %1584 = vmatpush1.msra.mxu0 0.0
        %1585 = vmatprep.subr.mxu0 0.0
        %1586 = vmatpush1.msra.mxu0 0.0
        %1587 = vmatprep.mubr.f32.mxu0 0.0
        %1588 = vmatmul.mubr.f32.gmra.mrb[0].mxu0 %v1521
        %v1589 = vpop.f32.mrb[0].mxu0
        %v1590 = vadd.f32 0.0, %v1589
        %v1591 = vpop.f32.mrb[0].mxu0
        %1592 = vdwg.mxu0
        %v1594 = vsel %vm1027, %v1373, 0
        %1596 = vmatprep.subr.mxu0 0.0
        %1597 = vmatpush1.msra.mxu0 %v1023
        %1598 = vmatprep.subr.mxu0 0.0
        %1599 = vmatpush1.msra.mxu0 0.0
        %1600 = vmatprep.subr.mxu0 0.0
        %1601 = vmatpush1.msra.mxu0 0.0
        %1602 = vmatprep.subr.mxu0 0.0
        %1603 = vmatpush1.msra.mxu0 0.0
        %1604 = vmatprep.subr.mxu0 0.0
        %1605 = vmatpush1.msra.mxu0 0.0
        %1606 = vmatprep.subr.mxu0 0.0
        %1607 = vmatpush1.msra.mxu0 0.0
        %1608 = vmatprep.subr.mxu0 0.0
        %1609 = vmatpush1.msra.mxu0 0.0
        %1610 = vmatprep.subr.mxu0 0.0
        %1611 = vmatpush1.msra.mxu0 0.0
        %1612 = vmatprep.subr.mxu0 0.0
        %1613 = vmatpush1.msra.mxu0 0.0
        %1614 = vmatprep.subr.mxu0 0.0
        %1615 = vmatpush1.msra.mxu0 0.0
        %1616 = vmatprep.subr.mxu0 0.0
        %1617 = vmatpush1.msra.mxu0 0.0
        %1618 = vmatprep.subr.mxu0 0.0
        %1619 = vmatpush1.msra.mxu0 0.0
        %1620 = vmatprep.subr.mxu0 0.0
        %1621 = vmatpush1.msra.mxu0 0.0
        %1622 = vmatprep.subr.mxu0 0.0
        %1623 = vmatpush1.msra.mxu0 0.0
        %1624 = vmatprep.subr.mxu0 0.0
        %1625 = vmatpush1.msra.mxu0 0.0
        %1626 = vmatprep.subr.mxu0 0.0
        %1627 = vmatpush1.msra.mxu0 0.0
        %1628 = vmatprep.subr.mxu0 0.0
        %1629 = vmatpush1.msra.mxu0 0.0
        %1630 = vmatprep.subr.mxu0 0.0
        %1631 = vmatpush1.msra.mxu0 0.0
        %1632 = vmatprep.subr.mxu0 0.0
        %1633 = vmatpush1.msra.mxu0 0.0
        %1634 = vmatprep.subr.mxu0 0.0
        %1635 = vmatpush1.msra.mxu0 0.0
        %1636 = vmatprep.subr.mxu0 0.0
        %1637 = vmatpush1.msra.mxu0 0.0
        %1638 = vmatprep.subr.mxu0 0.0
        %1639 = vmatpush1.msra.mxu0 0.0
        %1640 = vmatprep.subr.mxu0 0.0
        %1641 = vmatpush1.msra.mxu0 0.0
        %1642 = vmatprep.subr.mxu0 0.0
        %1643 = vmatpush1.msra.mxu0 0.0
        %1644 = vmatprep.subr.mxu0 0.0
        %1645 = vmatpush1.msra.mxu0 0.0
        %1646 = vmatprep.subr.mxu0 0.0
        %1647 = vmatpush1.msra.mxu0 0.0
        %1648 = vmatprep.subr.mxu0 0.0
        %1649 = vmatpush1.msra.mxu0 0.0
        %1650 = vmatprep.subr.mxu0 0.0
        %1651 = vmatpush1.msra.mxu0 0.0
        %1652 = vmatprep.subr.mxu0 0.0
        %1653 = vmatpush1.msra.mxu0 0.0
        %1654 = vmatprep.subr.mxu0 0.0
        %1655 = vmatpush1.msra.mxu0 0.0
        %1656 = vmatprep.subr.mxu0 0.0
        %1657 = vmatpush1.msra.mxu0 0.0
        %1658 = vmatprep.subr.mxu0 0.0
        %1659 = vmatpush1.msra.mxu0 0.0
        %1660 = vmatprep.mubr.f32.mxu0 0.0
        %1661 = vmatmul.mubr.f32.gmra.mrb[0].mxu0 %v1594
        %v1662 = vpop.f32.mrb[0].mxu0
        %v1663 = vadd.f32 0.0, %v1662
        %v1664 = vpop.f32.mrb[0].mxu0
        %1665 = vdwg.mxu0
        %1667 = vrot.lane.b32.xlu0 %v1517, 8
        %v1668 = vpop.permute.xlu0 %1667
        %1671 = vrot.lane.b32.xlu0 %v1590, 16
        %v1672 = vpop.permute.xlu0 %1671
        %1675 = vrot.lane.b32.xlu0 %v1663, 24
        %v1676 = vpop.permute.xlu0 %1675
        %v1678 = vsel %vm1027, %v1444, %v1668
        %vm1679 = vcmask 130048
        %v1680 = vsel %vm1679, %v1678, %v1672
        %vm1681 = vcmask 195584
        %v1682 = vsel %vm1681, %v1680, %v1676
        %v1683 = vld [vmem:[%s802] sm:$0xff]
        %v1684 = vld [vmem:[%s802 + $0x8] sm:$0xff]
        %v1685 = vld [vmem:[%s802 + $0x10] sm:$0xff]
        %v1686 = vld [vmem:[%s802 + $0x18] sm:$0xff]
        %v1687 = vld [vmem:[%s805] sm:$0x1]
        %v1689 = vlaneseq
        %v1690 = vshrl.u32 %v1689, 7
        %v1691 = vsub.s32 0, %v1690
        %v1692 = vrot.slane %v1687, %v1691
        %v1695 = vsel %vm850, %v1682, 0
        %1697 = vmatprep.subr.mxu0 0.0
        %1698 = vmatpush1.msra.mxu0 %v1683
        %1699 = vmatprep.subr.mxu0 0.0
        %1700 = vmatpush1.msra.mxu0 %v1684
        %1701 = vmatprep.subr.mxu0 0.0
        %1702 = vmatpush1.msra.mxu0 %v1685
        %1703 = vmatprep.subr.mxu0 0.0
        %1704 = vmatpush1.msra.mxu0 %v1686
        %1705 = vmatprep.subr.mxu0 0.0
        %1706 = vmatpush1.msra.mxu0 0.0
        %1707 = vmatprep.subr.mxu0 0.0
        %1708 = vmatpush1.msra.mxu0 0.0
        %1709 = vmatprep.subr.mxu0 0.0
        %1710 = vmatpush1.msra.mxu0 0.0
        %1711 = vmatprep.subr.mxu0 0.0
        %1712 = vmatpush1.msra.mxu0 0.0
        %1713 = vmatprep.subr.mxu0 0.0
        %1714 = vmatpush1.msra.mxu0 0.0
        %1715 = vmatprep.subr.mxu0 0.0
        %1716 = vmatpush1.msra.mxu0 0.0
        %1717 = vmatprep.subr.mxu0 0.0
        %1718 = vmatpush1.msra.mxu0 0.0
        %1719 = vmatprep.subr.mxu0 0.0
        %1720 = vmatpush1.msra.mxu0 0.0
        %1721 = vmatprep.subr.mxu0 0.0
        %1722 = vmatpush1.msra.mxu0 0.0
        %1723 = vmatprep.subr.mxu0 0.0
        %1724 = vmatpush1.msra.mxu0 0.0
        %1725 = vmatprep.subr.mxu0 0.0
        %1726 = vmatpush1.msra.mxu0 0.0
        %1727 = vmatprep.subr.mxu0 0.0
        %1728 = vmatpush1.msra.mxu0 0.0
        %1729 = vmatprep.subr.mxu0 0.0
        %1730 = vmatpush1.msra.mxu0 0.0
        %1731 = vmatprep.subr.mxu0 0.0
        %1732 = vmatpush1.msra.mxu0 0.0
        %1733 = vmatprep.subr.mxu0 0.0
        %1734 = vmatpush1.msra.mxu0 0.0
        %1735 = vmatprep.subr.mxu0 0.0
        %1736 = vmatpush1.msra.mxu0 0.0
        %1737 = vmatprep.subr.mxu0 0.0
        %1738 = vmatpush1.msra.mxu0 0.0
        %1739 = vmatprep.subr.mxu0 0.0
        %1740 = vmatpush1.msra.mxu0 0.0
        %1741 = vmatprep.subr.mxu0 0.0
        %1742 = vmatpush1.msra.mxu0 0.0
        %1743 = vmatprep.subr.mxu0 0.0
        %1744 = vmatpush1.msra.mxu0 0.0
        %1745 = vmatprep.subr.mxu0 0.0
        %1746 = vmatpush1.msra.mxu0 0.0
        %1747 = vmatprep.subr.mxu0 0.0
        %1748 = vmatpush1.msra.mxu0 0.0
        %1749 = vmatprep.subr.mxu0 0.0
        %1750 = vmatpush1.msra.mxu0 0.0
        %1751 = vmatprep.subr.mxu0 0.0
        %1752 = vmatpush1.msra.mxu0 0.0
        %1753 = vmatprep.subr.mxu0 0.0
        %1754 = vmatpush1.msra.mxu0 0.0
        %1755 = vmatprep.subr.mxu0 0.0
        %1756 = vmatpush1.msra.mxu0 0.0
        %1757 = vmatprep.subr.mxu0 0.0
        %1758 = vmatpush1.msra.mxu0 0.0
        %1759 = vmatprep.subr.mxu0 0.0
        %1760 = vmatpush1.msra.mxu0 0.0
        %1761 = vmatprep.mubr.f32.mxu0 0.0
        %1762 = vmatmul.mubr.f32.gmra.mrb[0].mxu0 %v1695
        %v1763 = vpop.f32.mrb[0].mxu0
        %v1764 = vadd.f32 %v1692, %v1763
        %v1765 = vpop.f32.mrb[0].mxu0
        %1766 = vdwg.mxu0
        %v1767 = vadd.f32 %v836, %v1764
        %v1768 = vld [vmem:[%s819] sm:$0x1]
        %v1769 = vld [vmem:[%s822] sm:$0x1]
        %v1770 = vsel %vm850, %v1767, 0.0
        %1771 = vadd.xlane.f32.xlu0 %v1770
        %v1772 = vpop.xlane.xlu0 %1771
        %v1773 = vrcp.pop 32.0
        %v1774 = vmul.f32 %v1772, %v1773
        %v1775 = vsub.f32 %v1767, %v1774
        %v1776 = vmul.f32 %v1775, %v1775
        %v1777 = vsel %vm850, %v1776, 0.0
        %1778 = vadd.xlane.f32.xlu0 %v1777
        %v1779 = vpop.xlane.xlu0 %1778
        %v1780 = vmul.f32 %v1779, %v1773
        %v1781 = vadd.f32 %v1780, 1e-05
        %v1782 = vrsqrt.pop %v1781
        %v1783 = vmul.f32 %v1775, %v1782
        %v1785 = vlaneseq
        %v1786 = vshrl.u32 %v1785, 7
        %v1787 = vsub.s32 0, %v1786
        %v1788 = vrot.slane %v1768, %v1787
        %v1790 = vmul.f32 %v1783, %v1788
        %v1792 = vlaneseq
        %v1793 = vshrl.u32 %v1792, 7
        %v1794 = vsub.s32 0, %v1793
        %v1795 = vrot.slane %v1769, %v1794
        %v1797 = vadd.f32 %v1790, %v1795
        %v1798 = vld [vmem:[%s676] sm:$0xff]
        %v1799 = vld [vmem:[%s676 + $0x8] sm:$0xff]
        %v1800 = vld [vmem:[%s676 + $0x10] sm:$0xff]
        %v1801 = vld [vmem:[%s676 + $0x18] sm:$0xff]
        %v1802 = vld [vmem:[%s808] sm:$0x1]
        %v1804 = vlaneseq
        %v1805 = vshrl.u32 %v1804, 7
        %v1806 = vsub.s32 0, %v1805
        %v1807 = vrot.slane %v1802, %v1806
        %v1810 = vsel %vm850, %v1797, 0
        %1812 = vmatprep.subr.mxu0 0.0
        %1813 = vmatpush1.msra.mxu0 %v1798
        %1814 = vmatprep.subr.mxu0 0.0
        %1815 = vmatpush1.msra.mxu0 %v1799
        %1816 = vmatprep.subr.mxu0 0.0
        %1817 = vmatpush1.msra.mxu0 %v1800
        %1818 = vmatprep.subr.mxu0 0.0
        %1819 = vmatpush1.msra.mxu0 %v1801
        %1820 = vmatprep.subr.mxu0 0.0
        %1821 = vmatpush1.msra.mxu0 0.0
        %1822 = vmatprep.subr.mxu0 0.0
        %1823 = vmatpush1.msra.mxu0 0.0
        %1824 = vmatprep.subr.mxu0 0.0
        %1825 = vmatpush1.msra.mxu0 0.0
        %1826 = vmatprep.subr.mxu0 0.0
        %1827 = vmatpush1.msra.mxu0 0.0
        %1828 = vmatprep.subr.mxu0 0.0
        %1829 = vmatpush1.msra.mxu0 0.0
        %1830 = vmatprep.subr.mxu0 0.0
        %1831 = vmatpush1.msra.mxu0 0.0
        %1832 = vmatprep.subr.mxu0 0.0
        %1833 = vmatpush1.msra.mxu0 0.0
        %1834 = vmatprep.subr.mxu0 0.0
        %1835 = vmatpush1.msra.mxu0 0.0
        %1836 = vmatprep.subr.mxu0 0.0
        %1837 = vmatpush1.msra.mxu0 0.0
        %1838 = vmatprep.subr.mxu0 0.0
        %1839 = vmatpush1.msra.mxu0 0.0
        %1840 = vmatprep.subr.mxu0 0.0
        %1841 = vmatpush1.msra.mxu0 0.0
        %1842 = vmatprep.subr.mxu0 0.0
        %1843 = vmatpush1.msra.mxu0 0.0
        %1844 = vmatprep.subr.mxu0 0.0
        %1845 = vmatpush1.msra.mxu0 0.0
        %1846 = vmatprep.subr.mxu0 0.0
        %1847 = vmatpush1.msra.mxu0 0.0
        %1848 = vmatprep.subr.mxu0 0.0
        %1849 = vmatpush1.msra.mxu0 0.0
        %1850 = vmatprep.subr.mxu0 0.0
        %1851 = vmatpush1.msra.mxu0 0.0
        %1852 = vmatprep.subr.mxu0 0.0
        %1853 = vmatpush1.msra.mxu0 0.0
        %1854 = vmatprep.subr.mxu0 0.0
        %1855 = vmatpush1.msra.mxu0 0.0
        %1856 = vmatprep.subr.mxu0 0.0
        %1857 = vmatpush1.msra.mxu0 0.0
        %1858 = vmatprep.subr.mxu0 0.0
        %1859 = vmatpush1.msra.mxu0 0.0
        %1860 = vmatprep.subr.mxu0 0.0
        %1861 = vmatpush1.msra.mxu0 0.0
        %1862 = vmatprep.subr.mxu0 0.0
        %1863 = vmatpush1.msra.mxu0 0.0
        %1864 = vmatprep.subr.mxu0 0.0
        %1865 = vmatpush1.msra.mxu0 0.0
        %1866 = vmatprep.subr.mxu0 0.0
        %1867 = vmatpush1.msra.mxu0 0.0
        %1868 = vmatprep.subr.mxu0 0.0
        %1869 = vmatpush1.msra.mxu0 0.0
        %1870 = vmatprep.subr.mxu0 0.0
        %1871 = vmatpush1.msra.mxu0 0.0
        %1872 = vmatprep.subr.mxu0 0.0
        %1873 = vmatpush1.msra.mxu0 0.0
        %1874 = vmatprep.subr.mxu0 0.0
        %1875 = vmatpush1.msra.mxu0 0.0
        %1876 = vmatprep.mubr.f32.mxu0 0.0
        %1877 = vmatmul.mubr.f32.gmra.mrb[0].mxu0 %v1810
        %v1878 = vpop.f32.mrb[0].mxu0
        %v1879 = vadd.f32 %v1807, %v1878
        %v1880 = vpop.f32.mrb[0].mxu0
        %1881 = vdwg.mxu0
        %v1882 = vmax.f32 %v1879, 0.0
        %v1883 = vld [vmem:[%s813] sm:$0xff]
        %v1884 = vld [vmem:[%s813 + $0x8] sm:$0xff]
        %v1885 = vld [vmem:[%s813 + $0x10] sm:$0xff]
        %v1886 = vld [vmem:[%s813 + $0x18] sm:$0xff]
        %v1887 = vld [vmem:[%s813 + $0x20] sm:$0xff]
        %v1888 = vld [vmem:[%s813 + $0x28] sm:$0xff]
        %v1889 = vld [vmem:[%s813 + $0x30] sm:$0xff]
        %v1890 = vld [vmem:[%s813 + $0x38] sm:$0xff]
        %v1891 = vld [vmem:[%s816] sm:$0x1]
        %v1893 = vlaneseq
        %v1894 = vshrl.u32 %v1893, 7
        %v1895 = vsub.s32 0, %v1894
        %v1896 = vrot.slane %v1891, %v1895
        %vm1898 = vcmask 523264
        %v1900 = vsel %vm1898, %v1882, 0
        %1902 = vmatprep.subr.mxu0 0.0
        %1903 = vmatpush1.msra.mxu0 %v1883
        %1904 = vmatprep.subr.mxu0 0.0
        %1905 = vmatpush1.msra.mxu0 %v1884
        %1906 = vmatprep.subr.mxu0 0.0
        %1907 = vmatpush1.msra.mxu0 %v1885
        %1908 = vmatprep.subr.mxu0 0.0
        %1909 = vmatpush1.msra.mxu0 %v1886
        %1910 = vmatprep.subr.mxu0 0.0
        %1911 = vmatpush1.msra.mxu0 %v1887
        %1912 = vmatprep.subr.mxu0 0.0
        %1913 = vmatpush1.msra.mxu0 %v1888
        %1914 = vmatprep.subr.mxu0 0.0
        %1915 = vmatpush1.msra.mxu0 %v1889
        %1916 = vmatprep.subr.mxu0 0.0
        %1917 = vmatpush1.msra.mxu0 %v1890
        %1918 = vmatprep.subr.mxu0 0.0
        %1919 = vmatpush1.msra.mxu0 0.0
        %1920 = vmatprep.subr.mxu0 0.0
        %1921 = vmatpush1.msra.mxu0 0.0
        %1922 = vmatprep.subr.mxu0 0.0
        %1923 = vmatpush1.msra.mxu0 0.0
        %1924 = vmatprep.subr.mxu0 0.0
        %1925 = vmatpush1.msra.mxu0 0.0
        %1926 = vmatprep.subr.mxu0 0.0
        %1927 = vmatpush1.msra.mxu0 0.0
        %1928 = vmatprep.subr.mxu0 0.0
        %1929 = vmatpush1.msra.mxu0 0.0
        %1930 = vmatprep.subr.mxu0 0.0
        %1931 = vmatpush1.msra.mxu0 0.0
        %1932 = vmatprep.subr.mxu0 0.0
        %1933 = vmatpush1.msra.mxu0 0.0
        %1934 = vmatprep.subr.mxu0 0.0
        %1935 = vmatpush1.msra.mxu0 0.0
        %1936 = vmatprep.subr.mxu0 0.0
        %1937 = vmatpush1.msra.mxu0 0.0
        %1938 = vmatprep.subr.mxu0 0.0
        %1939 = vmatpush1.msra.mxu0 0.0
        %1940 = vmatprep.subr.mxu0 0.0
        %1941 = vmatpush1.msra.mxu0 0.0
        %1942 = vmatprep.subr.mxu0 0.0
        %1943 = vmatpush1.msra.mxu0 0.0
        %1944 = vmatprep.subr.mxu0 0.0
        %1945 = vmatpush1.msra.mxu0 0.0
        %1946 = vmatprep.subr.mxu0 0.0
        %1947 = vmatpush1.msra.mxu0 0.0
        %1948 = vmatprep.subr.mxu0 0.0
        %1949 = vmatpush1.msra.mxu0 0.0
        %1950 = vmatprep.subr.mxu0 0.0
        %1951 = vmatpush1.msra.mxu0 0.0
        %1952 = vmatprep.subr.mxu0 0.0
        %1953 = vmatpush1.msra.mxu0 0.0
        %1954 = vmatprep.subr.mxu0 0.0
        %1955 = vmatpush1.msra.mxu0 0.0
        %1956 = vmatprep.subr.mxu0 0.0
        %1957 = vmatpush1.msra.mxu0 0.0
        %1958 = vmatprep.subr.mxu0 0.0
        %1959 = vmatpush1.msra.mxu0 0.0
        %1960 = vmatprep.subr.mxu0 0.0
        %1961 = vmatpush1.msra.mxu0 0.0
        %1962 = vmatprep.subr.mxu0 0.0
        %1963 = vmatpush1.msra.mxu0 0.0
        %1964 = vmatprep.subr.mxu0 0.0
        %1965 = vmatpush1.msra.mxu0 0.0
        %1966 = vmatprep.mubr.f32.mxu0 0.0
        %1967 = vmatmul.mubr.f32.gmra.mrb[0].mxu0 %v1900
        %v1968 = vpop.f32.mrb[0].mxu0
        %v1969 = vadd.f32 %v1896, %v1968
        %v1970 = vpop.f32.mrb[0].mxu0
        %1971 = vdwg.mxu0
        %v1972 = vadd.f32 %v1797, %v1969
        %v1973 = vld [vmem:[%s825] sm:$0x1]
        %v1974 = vld [vmem:[%s828] sm:$0x1]
        %v1975 = vsel %vm850, %v1972, 0.0
        %1976 = vadd.xlane.f32.xlu0 %v1975
        %v1977 = vpop.xlane.xlu0 %1976
        %v1978 = vmul.f32 %v1977, %v1773
        %v1979 = vsub.f32 %v1972, %v1978
        %v1980 = vmul.f32 %v1979, %v1979
        %v1981 = vsel %vm850, %v1980, 0.0
        %1982 = vadd.xlane.f32.xlu0 %v1981
        %v1983 = vpop.xlane.xlu0 %1982
        %v1984 = vmul.f32 %v1983, %v1773
        %v1985 = vadd.f32 %v1984, 1e-05
        %v1986 = vrsqrt.pop %v1985
        %v1987 = vmul.f32 %v1979, %v1986
        %v1989 = vlaneseq
        %v1990 = vshrl.u32 %v1989, 7
        %v1991 = vsub.s32 0, %v1990
        %v1992 = vrot.slane %v1973, %v1991
        %v1994 = vmul.f32 %v1987, %v1992
        %v1996 = vlaneseq
        %v1997 = vshrl.u32 %v1996, 7
        %v1998 = vsub.s32 0, %v1997
        %v1999 = vrot.slane %v1974, %v1998
        %v2001 = vadd.f32 %v1994, %v1999
        %2002 = vst.msk [vmem:[#allocation2] sm:$0xff] %vm850, %v2001
        %2003 = vst.msk [vmem:[%s781] sm:$0xff] %vm850, %v2001
        %s2004 = sand.u32 %s472, 1
        %s2005 = scalar_lea.sflag [#allocation5], %s2004
        %s2006 = sand.u32 %s472, 1
        %s2007 = smul.addr %s2006, 8
        %s2008 = scalar_lea.vmem [#allocation9], %s2007
        // Predicated region
        $region101: #{tpu_custom_call.1} parent=83 // pred_check
          %p2009 = pneg %p482
        $region102: #{tpu_custom_call.1} parent=83 // pred_check_branch
          %2011 = sbr.rel (%p2009) target = $region104
        $region103: #{tpu_custom_call.1} parent=83 // pred_region
          %s2013 = ssub.s32 128, 128
          %2014 = vsyncadd %s2005, %s2013
          %s2015 = smul.addr %s40, 128
          %s2016 = scalar_lea.hbm %s16, %s2015
          %s2018 = sshll.u32 %s2008, 4
          %s2019 = int_to_ptr.vmem [resolvable:$true] %s2018
          %2021 = dma.vmem_to_hbm [thread:$0]  %s2019, 128, %s2016, %s2005
        $region104: #{tpu_custom_call.1} parent=83 // pred_fallthru
          _
      $region84: #{tpu_custom_call.1} parent=5 // pred_fallthru
        _
      %p2022 = scmp.le.s32.totalorder 2, %s31
      // Predicated region
      $region105: #{tpu_custom_call.1} parent=5 // pred_check
        %p2023 = pneg %p2022
      $region106: #{tpu_custom_call.1} parent=5 // pred_check_branch
        %2025 = sbr.rel (%p2023) target = $region108
      $region107: #{tpu_custom_call.1} parent=5 // pred_region
        %s2026 = ssub.s32 %s31, 2
        // Predicated region
        $region109: #{tpu_custom_call.1} parent=107 // pred_check
          %p2027 = pneg %p488
        $region110: #{tpu_custom_call.1} parent=107 // pred_check_branch
          %2029 = sbr.rel (%p2027) target = $region112
        $region111: #{tpu_custom_call.1} parent=107 // pred_region
          %s2030 = sand.u32 %s473, 1
          %s2031 = scalar_lea.sflag [#allocation5], %s2030
          %s2032 = sand.u32 %s473, 1
          %s2033 = smul.addr %s2032, 8
          %s2034 = scalar_lea.vmem [#allocation9], %s2033
          %2035 = dma.done %s2031, 128
        $region112: #{tpu_custom_call.1} parent=107 // pred_fallthru
          _
      $region108: #{tpu_custom_call.1} parent=5 // pred_fallthru
        _
    $region6: #{tpu_custom_call.1} parent=1 // loop_footer
      %s35 = sadd.s32 1, %s31
    $region7: #{tpu_custom_call.1} parent=1 // loop_footer_branch
      %30 = sbr.rel target = $region3
    $region8: #{tpu_custom_call.1} parent=1 // loop_exit
      _
    %2036 = vsyncpa [#allocation4], 1
    %s2037 = scalar_lea.sflag [#allocation4], 1
    %2038 = vsyncpa %s2037, 1
    %2039 = vsyncpa [#allocation7], 1
    %s2040 = scalar_lea.sflag [#allocation7], 1
    %2041 = vsyncpa %s2040, 1
    %2042 = vsyncpa [#allocation5], 1
    %s2043 = scalar_lea.sflag [#allocation5], 1
    %2044 = vsyncpa %s2043, 1

</llo_original>
